<compile_context>
chip_gen: v6e
topology: v6e:2x2x1
jax: 0.10.0
libtpu: 0.0.40
codegen_flags: <defaults>
</compile_context>

<pallas_src>
import math
import functools

import jax
import jax.numpy as jnp
from jax import lax
from jax.experimental import pallas as pl
from jax.experimental.pallas import tpu as pltpu


# -----------------------------------------------------------------------------
# Fused Encoder-stack kernel: grid = (batch, layer); one (S, D) slab per step.
# -----------------------------------------------------------------------------
def encoder_stack_kernel(x_ref, wqkv_ref, wz_w_ref, wz_b_ref,
                         w1_ref, b1_ref, w2_ref, b2_ref, o_ref, *, head, q):
    l = pl.program_id(1)
    hq = head * q

    # Layer 0 consumes x; later layers consume the previous layer's output,
    # which stays resident in this VMEM output block across the L grid axis.
    @pl.when(l == 0)
    def _():
        o_ref[...] = x_ref[...]

    x = o_ref[...]                                   # [S, D] f32 activation
    xb = x.astype(jnp.bfloat16)

    # ---- multi-head self-attention -----------------------------------------
    # Fused Q|K|V projection, one lane-dense matmul; single bf16 cast of the
    # result (accuracy already bounded by the bf16 MXU feed).
    qkv = jnp.dot(xb, wqkv_ref[...],
                  preferred_element_type=jnp.float32).astype(jnp.bfloat16)  # [S, 3*HQ]

    z = None                                          # f32 [S, D] accumulator
    # head == 2 here -> static unroll is fine; switch to lax.fori_loop with a
    # carried accumulator if head grows (bounds vreg live ranges).
    for h in range(head):
        qh = qkv[:, h * q:(h + 1) * q]                # [S, Q] bf16 (Wq pre-scaled)
        kh = qkv[:, hq + h * q: hq + (h + 1) * q]     # [S, Q] bf16
        vh = qkv[:, 2 * hq + h * q: 2 * hq + (h + 1) * q]

        # Contract the last dims directly -> no explicit kh.T (no XLU vxpose).
        scores = lax.dot_general(qh, kh, (((1,), (1,)), ((), ())),
                                 preferred_element_type=jnp.float32)       # [S, S]
        scores = scores - jnp.max(scores, axis=-1, keepdims=True)
        p = jnp.exp(scores)                            # f32 element-wise (v5e-safe)
        p = p * pl.reciprocal(jnp.sum(p, axis=-1, keepdims=True), approx=True)

        hv = jnp.dot(p.astype(jnp.bfloat16), vh,
                     preferred_element_type=jnp.float32)                    # [S, Q]
        # Fold the output projection per head -> no concat of head outputs.
        zh = jnp.dot(hv.astype(jnp.bfloat16), wz_w_ref[pl.ds(h * q, q), :],
                     preferred_element_type=jnp.float32)                    # [S, D]
        z = zh if z is None else z + zh

    z = z + wz_b_ref[...]                              # bias added once
    y = z + x
    # F.normalize(dim=2): per-token L2 norm over features, PyTorch clamp
    # semantics (x / max(||x||, 1e-12)).
    y = y * lax.rsqrt(jnp.maximum(jnp.sum(y * y, axis=-1, keepdims=True), 1e-24))

    # ---- FFN + residual + F.normalize (default dim=1 == sequence axis) ------
    h1 = jnp.dot(y.astype(jnp.bfloat16), w1_ref[...],
                 preferred_element_type=jnp.float32) + b1_ref[...]
    h1 = jnp.maximum(h1, 0.0)                          # ReLU
    f = jnp.dot(h1.astype(jnp.bfloat16), w2_ref[...],
                preferred_element_type=jnp.float32) + b2_ref[...]
    out = f + y
    # PyTorch F.normalize default dim=1 on [B,S,D] -> axis 0 of this [S,D] tile.
    out = out * lax.rsqrt(jnp.maximum(jnp.sum(out * out, axis=0, keepdims=True), 1e-24))

    o_ref[...] = out.astype(o_ref.dtype)


# -----------------------------------------------------------------------------
# Wrappers
# -----------------------------------------------------------------------------
def encoder(x, stacked, *, head, q):
    """Run the full Encoder (L stacked layers) as one fused pallas_call."""
    B, S, D = x.shape
    L = stacked["wqkv"].shape[0]
    HQ = head * q
    FDIM = stacked["w1"].shape[2]

    # Advisory cost hint for XLA scheduling around the custom call.
    flops_per = (6 * S * D * HQ                 # fused QKV
                 + 4 * head * S * S * q         # scores + attn*V
                 + 2 * S * HQ * D               # per-head Wz accumulation
                 + 4 * S * D * FDIM)            # FFN
    flops = int(B * L * flops_per)
    transcendentals = int(B * L * head * S * S)  # exp in softmax
    bytes_accessed = int(2 * B * S * D * 4                                  # x in, out
                         + B * L * ((3 * D * HQ + HQ * D + 2 * D * FDIM) * 2  # bf16 W
                                    + (2 * D + FDIM) * 4))                    # biases
    cost = pl.CostEstimate(flops=flops, transcendentals=transcendentals,
                           bytes_accessed=bytes_accessed)

    kernel = functools.partial(encoder_stack_kernel, head=head, q=q)
    return pl.pallas_call(
        kernel,
        out_shape=jax.ShapeDtypeStruct((B, S, D), x.dtype),
        grid=(B, L),                                       # L innermost (sequential)
        in_specs=[
            pl.BlockSpec((None, S, D), lambda b, l: (b, 0, 0)),        # x (fetched once per b)
            pl.BlockSpec((None, D, 3 * HQ), lambda b, l: (l, 0, 0)),   # Wq|Wk|Wv fused
            pl.BlockSpec((None, HQ, D), lambda b, l: (l, 0, 0)),       # Wz
            pl.BlockSpec((None, 1, D), lambda b, l: (l, 0, 0)),        # Wz bias
            pl.BlockSpec((None, D, FDIM), lambda b, l: (l, 0, 0)),     # FFN W1
            pl.BlockSpec((None, 1, FDIM), lambda b, l: (l, 0, 0)),     # FFN b1
            pl.BlockSpec((None, FDIM, D), lambda b, l: (l, 0, 0)),     # FFN W2
            pl.BlockSpec((None, 1, D), lambda b, l: (l, 0, 0)),        # FFN b2
        ],
        # Same block index for every l -> activation resident across layers.
        out_specs=pl.BlockSpec((None, S, D), lambda b, l: (b, 0, 0)),
        compiler_params=pltpu.CompilerParams(
            dimension_semantics=("parallel", "arbitrary")),
        cost_estimate=cost,
    )(x, stacked["wqkv"], stacked["wz_w"], stacked["wz_b"],
      stacked["w1"], stacked["b1"], stacked["w2"], stacked["b2"])


def init_layer_params(key, head, dim, q, ffn):
    ks = jax.random.split(key, 6)
    s = 0.02
    bf = jnp.bfloat16
    wq = jax.random.normal(ks[0], (dim, head * q), jnp.float32) * s
    wk = jax.random.normal(ks[1], (dim, head * q), jnp.float32) * s
    wv = jax.random.normal(ks[2], (dim, head * q), jnp.float32) * s
    # 1/sqrt(q) softmax scale folded into Wq (mathematically identical, zero
    # in-kernel cost); Q|K|V concatenated so the kernel does one matmul.
    wqkv = jnp.concatenate([wq * (1.0 / math.sqrt(q)), wk, wv], axis=1).astype(bf)
    return {
        "wqkv": wqkv,                                                        # [D, 3*HQ] bf16
        "wz_w": (jax.random.normal(ks[3], (head * q, dim), jnp.float32) * s).astype(bf),
        "wz_b": jnp.zeros((1, dim), jnp.float32),
        "w1":   (jax.random.normal(ks[4], (dim, ffn), jnp.float32) * s).astype(bf),
        "b1":   jnp.zeros((1, ffn), jnp.float32),
        "w2":   (jax.random.normal(ks[5], (ffn, dim), jnp.float32) * s).astype(bf),
        "b2":   jnp.zeros((1, dim), jnp.float32),
    }


def stack_layer_params(layer_params):
    """Stack per-layer params into [L, ...] arrays for the layer grid axis."""
    return {k: jnp.stack([p[k] for p in layer_params], axis=0)
            for k in layer_params[0]}


if __name__ == "__main__":
    # Small, lane-dense shapes consistent with the module (dim/q/ffn scaled
    # down from 512/64/2048 but keeping D, H*Q, FFN multiples of 128).
    B, S, D = 2, 16, 128
    HEAD, Q, FFN = 2, 64, 256
    N_LAYERS = HEAD  # Encoder(head) builds `head` EncoderLayers

    key = jax.random.PRNGKey(0)
    k_x, *k_layers = jax.random.split(key, N_LAYERS + 1)
    x = jax.random.normal(k_x, (B, S, D), jnp.float32)
    stacked = stack_layer_params(
        [init_layer_params(k, HEAD, D, Q, FFN) for k in k_layers])

    run = jax.jit(functools.partial(encoder, head=HEAD, q=Q))
    out = run(x, stacked)
    jax.block_until_ready(out)
    assert out.shape == (B, S, D)
    assert bool(jnp.all(jnp.isfinite(out)))
    print("KERNEL_OK")
</pallas_src>

<mosaic_0001>
module attributes {stable_mosaic.version = 11 : i64} {
  func.func @encoder_stack_kernel(%arg0: i32, %arg1: i32, %arg2: memref<1x16x128xf32, #tpu.memory_space<vmem>>, %arg3: memref<1x128x384xbf16, #tpu.memory_space<vmem>>, %arg4: memref<1x128x128xbf16, #tpu.memory_space<vmem>>, %arg5: memref<1x1x128xf32, #tpu.memory_space<vmem>>, %arg6: memref<1x128x256xbf16, #tpu.memory_space<vmem>>, %arg7: memref<1x1x256xf32, #tpu.memory_space<vmem>>, %arg8: memref<1x256x128xbf16, #tpu.memory_space<vmem>>, %arg9: memref<1x1x128xf32, #tpu.memory_space<vmem>>, %arg10: memref<1x16x128xf32, #tpu.memory_space<vmem>>) attributes {dimension_semantics = [#tpu.dimension_semantics<parallel>, #tpu.dimension_semantics<arbitrary>], iteration_bounds = array<i64: 2, 2>, scalar_prefetch = 0 : i64, scratch_operands = 0 : i64, tpu.core_type = #tpu.core_type<tc>, window_params = [{transform_indices = @transform_0, window_bounds = array<i64: 1, 16, 128>}, {transform_indices = @transform_1, window_bounds = array<i64: 1, 128, 384>}, {transform_indices = @transform_2, window_bounds = array<i64: 1, 128, 128>}, {transform_indices = @transform_3, window_bounds = array<i64: 1, 1, 128>}, {transform_indices = @transform_4, window_bounds = array<i64: 1, 128, 256>}, {transform_indices = @transform_5, window_bounds = array<i64: 1, 1, 256>}, {transform_indices = @transform_6, window_bounds = array<i64: 1, 256, 128>}, {transform_indices = @transform_7, window_bounds = array<i64: 1, 1, 128>}, {transform_indices = @transform_8, window_bounds = array<i64: 1, 16, 128>}]} {
    %c0_i32 = arith.constant 0 : i32
    %0 = arith.cmpi eq, %arg1, %c0_i32 : i32
    %1 = arith.extui %0 : i1 to i32
    %c0_i32_0 = arith.constant 0 : i32
    %2 = arith.cmpi ne, %1, %c0_i32_0 : i32
    scf.if %2 {
      %c0_46 = arith.constant 0 : index
      %c0_47 = arith.constant 0 : index
      %c0_48 = arith.constant 0 : index
      %94 = vector.load %arg2[%c0_46, %c0_47, %c0_48] : memref<1x16x128xf32, #tpu.memory_space<vmem>>, vector<1x16x128xf32>
      %95 = vector.shape_cast %94 : vector<1x16x128xf32> to vector<16x128xf32>
      %c0_49 = arith.constant 0 : index
      %c0_50 = arith.constant 0 : index
      %c0_51 = arith.constant 0 : index
      %96 = vector.load %arg10[%c0_49, %c0_50, %c0_51] : memref<1x16x128xf32, #tpu.memory_space<vmem>>, vector<1x16x128xf32>
      %97 = vector.shape_cast %96 : vector<1x16x128xf32> to vector<16x128xf32>
      %98 = vector.shape_cast %95 : vector<16x128xf32> to vector<1x16x128xf32>
      tpu.vector_store %arg10[%c0_49, %c0_50, %c0_51], %98 {strides = array<i32>} : memref<1x16x128xf32, #tpu.memory_space<vmem>>, vector<1x16x128xf32>,
    } else {
    }
    %c0 = arith.constant 0 : index
    %c0_1 = arith.constant 0 : index
    %c0_2 = arith.constant 0 : index
    %3 = vector.load %arg10[%c0, %c0_1, %c0_2] : memref<1x16x128xf32, #tpu.memory_space<vmem>>, vector<1x16x128xf32>
    %4 = vector.shape_cast %3 : vector<1x16x128xf32> to vector<16x128xf32>
    %5 = arith.truncf %4 : vector<16x128xf32> to vector<16x128xbf16>
    %c0_3 = arith.constant 0 : index
    %c0_4 = arith.constant 0 : index
    %c0_5 = arith.constant 0 : index
    %6 = vector.load %arg3[%c0_3, %c0_4, %c0_5] : memref<1x128x384xbf16, #tpu.memory_space<vmem>>, vector<1x128x384xbf16>
    %7 = vector.shape_cast %6 : vector<1x128x384xbf16> to vector<128x384xbf16>
    %cst = arith.constant dense<0.000000e+00> : vector<16x384xf32>
    %8 = tpu.matmul %5, %7, %cst {dimension_numbers = #tpu.dot_dimension_numbers<[1], [0], [0], [1], [0, 0, 1, 1], [], []>} : vector<16x128xbf16>, vector<128x384xbf16>, vector<16x384xf32> -> vector<16x384xf32>
    %9 = arith.truncf %8 : vector<16x384xf32> to vector<16x384xbf16>
    %10 = vector.extract_strided_slice %9 {offsets = [0, 0], sizes = [16, 64], strides = [1, 1]} : vector<16x384xbf16> to vector<16x64xbf16>
    %11 = vector.extract_strided_slice %9 {offsets = [0, 128], sizes = [16, 64], strides = [1, 1]} : vector<16x384xbf16> to vector<16x64xbf16>
    %12 = vector.extract_strided_slice %9 {offsets = [0, 256], sizes = [16, 64], strides = [1, 1]} : vector<16x384xbf16> to vector<16x64xbf16>
    %cst_6 = arith.constant dense<0.000000e+00> : vector<16x16xf32>
    %13 = tpu.matmul %10, %11, %cst_6 {dimension_numbers = #tpu.dot_dimension_numbers<[1], [1], [0], [0], [0, 0, 1, 0], [], []>} : vector<16x64xbf16>, vector<16x64xbf16>, vector<16x16xf32> -> vector<16x16xf32>
    %cst_7 = arith.constant dense<0xFF800000> : vector<16xf32>
    %14 = vector.multi_reduction <maximumf>, %13, %cst_7 [1] : vector<16x16xf32> to vector<16xf32>
    %15 = vector.shape_cast %14 : vector<16xf32> to vector<16x1xf32>
    %16 = vector.broadcast %15 : vector<16x1xf32> to vector<16x16xf32>
    %17 = arith.subf %13, %16 : vector<16x16xf32>
    %18 = math.exp %17 : vector<16x16xf32>
    %cst_8 = arith.constant dense<0.000000e+00> : vector<16xf32>
    %19 = vector.multi_reduction <add>, %18, %cst_8 [1] : vector<16x16xf32> to vector<16xf32>
    %20 = vector.shape_cast %19 : vector<16xf32> to vector<16x1xf32>
    %21 = tpu.reciprocal %20 {approx = true} : vector<16x1xf32> -> vector<16x1xf32>
    %22 = vector.broadcast %21 : vector<16x1xf32> to vector<16x16xf32>
    %23 = arith.mulf %18, %22 : vector<16x16xf32>
    %24 = arith.truncf %23 : vector<16x16xf32> to vector<16x16xbf16>
    %cst_9 = arith.constant dense<0.000000e+00> : vector<16x64xf32>
    %25 = tpu.matmul %24, %12, %cst_9 {dimension_numbers = #tpu.dot_dimension_numbers<[1], [0], [0], [1], [0, 0, 1, 1], [], []>} : vector<16x16xbf16>, vector<16x64xbf16>, vector<16x64xf32> -> vector<16x64xf32>
    %26 = arith.truncf %25 : vector<16x64xf32> to vector<16x64xbf16>
    %c0_10 = arith.constant 0 : index
    %c0_11 = arith.constant 0 : index
    %c0_12 = arith.constant 0 : index
    %27 = vector.load %arg4[%c0_10, %c0_11, %c0_12] : memref<1x128x128xbf16, #tpu.memory_space<vmem>>, vector<1x64x128xbf16>
    %28 = vector.shape_cast %27 : vector<1x64x128xbf16> to vector<64x128xbf16>
    %cst_13 = arith.constant dense<0.000000e+00> : vector<16x128xf32>
    %29 = tpu.matmul %26, %28, %cst_13 {dimension_numbers = #tpu.dot_dimension_numbers<[1], [0], [0], [1], [0, 0, 1, 1], [], []>} : vector<16x64xbf16>, vector<64x128xbf16>, vector<16x128xf32> -> vector<16x128xf32>
    %30 = vector.extract_strided_slice %9 {offsets = [0, 64], sizes = [16, 64], strides = [1, 1]} : vector<16x384xbf16> to vector<16x64xbf16>
    %31 = vector.extract_strided_slice %9 {offsets = [0, 192], sizes = [16, 64], strides = [1, 1]} : vector<16x384xbf16> to vector<16x64xbf16>
    %32 = vector.extract_strided_slice %9 {offsets = [0, 320], sizes = [16, 64], strides = [1, 1]} : vector<16x384xbf16> to vector<16x64xbf16>
    %cst_14 = arith.constant dense<0.000000e+00> : vector<16x16xf32>
    %33 = tpu.matmul %30, %31, %cst_14 {dimension_numbers = #tpu.dot_dimension_numbers<[1], [1], [0], [0], [0, 0, 1, 0], [], []>} : vector<16x64xbf16>, vector<16x64xbf16>, vector<16x16xf32> -> vector<16x16xf32>
    %cst_15 = arith.constant dense<0xFF800000> : vector<16xf32>
    %34 = vector.multi_reduction <maximumf>, %33, %cst_15 [1] : vector<16x16xf32> to vector<16xf32>
    %35 = vector.shape_cast %34 : vector<16xf32> to vector<16x1xf32>
    %36 = vector.broadcast %35 : vector<16x1xf32> to vector<16x16xf32>
    %37 = arith.subf %33, %36 : vector<16x16xf32>
    %38 = math.exp %37 : vector<16x16xf32>
    %cst_16 = arith.constant dense<0.000000e+00> : vector<16xf32>
    %39 = vector.multi_reduction <add>, %38, %cst_16 [1] : vector<16x16xf32> to vector<16xf32>
    %40 = vector.shape_cast %39 : vector<16xf32> to vector<16x1xf32>
    %41 = tpu.reciprocal %40 {approx = true} : vector<16x1xf32> -> vector<16x1xf32>
    %42 = vector.broadcast %41 : vector<16x1xf32> to vector<16x16xf32>
    %43 = arith.mulf %38, %42 : vector<16x16xf32>
    %44 = arith.truncf %43 : vector<16x16xf32> to vector<16x16xbf16>
    %cst_17 = arith.constant dense<0.000000e+00> : vector<16x64xf32>
    %45 = tpu.matmul %44, %32, %cst_17 {dimension_numbers = #tpu.dot_dimension_numbers<[1], [0], [0], [1], [0, 0, 1, 1], [], []>} : vector<16x16xbf16>, vector<16x64xbf16>, vector<16x64xf32> -> vector<16x64xf32>
    %46 = arith.truncf %45 : vector<16x64xf32> to vector<16x64xbf16>
    %c0_18 = arith.constant 0 : index
    %c64 = arith.constant 64 : index
    %c0_19 = arith.constant 0 : index
    %47 = vector.load %arg4[%c0_18, %c64, %c0_19] : memref<1x128x128xbf16, #tpu.memory_space<vmem>>, vector<1x64x128xbf16>
    %48 = vector.shape_cast %47 : vector<1x64x128xbf16> to vector<64x128xbf16>
    %cst_20 = arith.constant dense<0.000000e+00> : vector<16x128xf32>
    %49 = tpu.matmul %46, %48, %cst_20 {dimension_numbers = #tpu.dot_dimension_numbers<[1], [0], [0], [1], [0, 0, 1, 1], [], []>} : vector<16x64xbf16>, vector<64x128xbf16>, vector<16x128xf32> -> vector<16x128xf32>
    %50 = arith.addf %29, %49 : vector<16x128xf32>
    %c0_21 = arith.constant 0 : index
    %c0_22 = arith.constant 0 : index
    %c0_23 = arith.constant 0 : index
    %51 = vector.load %arg5[%c0_21, %c0_22, %c0_23] : memref<1x1x128xf32, #tpu.memory_space<vmem>>, vector<1x1x128xf32>
    %52 = vector.shape_cast %51 : vector<1x1x128xf32> to vector<1x128xf32>
    %53 = vector.broadcast %52 : vector<1x128xf32> to vector<16x128xf32>
    %54 = arith.addf %50, %53 : vector<16x128xf32>
    %55 = arith.addf %54, %4 : vector<16x128xf32>
    %56 = arith.mulf %55, %55 : vector<16x128xf32>
    %cst_24 = arith.constant dense<0.000000e+00> : vector<16xf32>
    %57 = vector.multi_reduction <add>, %56, %cst_24 [1] : vector<16x128xf32> to vector<16xf32>
    %58 = vector.shape_cast %57 : vector<16xf32> to vector<16x1xf32>
    %cst_25 = arith.constant 1.000000e-24 : f32
    %59 = vector.broadcast %cst_25 : f32 to vector<16x1xf32>
    %60 = arith.maximumf %58, %59 : vector<16x1xf32>
    %61 = math.rsqrt %60 : vector<16x1xf32>
    %62 = vector.broadcast %61 : vector<16x1xf32> to vector<16x128xf32>
    %63 = arith.mulf %55, %62 : vector<16x128xf32>
    %64 = arith.truncf %63 : vector<16x128xf32> to vector<16x128xbf16>
    %c0_26 = arith.constant 0 : index
    %c0_27 = arith.constant 0 : index
    %c0_28 = arith.constant 0 : index
    %65 = vector.load %arg6[%c0_26, %c0_27, %c0_28] : memref<1x128x256xbf16, #tpu.memory_space<vmem>>, vector<1x128x256xbf16>
    %66 = vector.shape_cast %65 : vector<1x128x256xbf16> to vector<128x256xbf16>
    %cst_29 = arith.constant dense<0.000000e+00> : vector<16x256xf32>
    %67 = tpu.matmul %64, %66, %cst_29 {dimension_numbers = #tpu.dot_dimension_numbers<[1], [0], [0], [1], [0, 0, 1, 1], [], []>} : vector<16x128xbf16>, vector<128x256xbf16>, vector<16x256xf32> -> vector<16x256xf32>
    %c0_30 = arith.constant 0 : index
    %c0_31 = arith.constant 0 : index
    %c0_32 = arith.constant 0 : index
    %68 = vector.load %arg7[%c0_30, %c0_31, %c0_32] : memref<1x1x256xf32, #tpu.memory_space<vmem>>, vector<1x1x256xf32>
    %69 = vector.shape_cast %68 : vector<1x1x256xf32> to vector<1x256xf32>
    %70 = vector.broadcast %69 : vector<1x256xf32> to vector<16x256xf32>
    %71 = arith.addf %67, %70 : vector<16x256xf32>
    %cst_33 = arith.constant 0.000000e+00 : f32
    %72 = vector.broadcast %cst_33 : f32 to vector<16x256xf32>
    %73 = arith.maximumf %71, %72 : vector<16x256xf32>
    %74 = arith.truncf %73 : vector<16x256xf32> to vector<16x256xbf16>
    %c0_34 = arith.constant 0 : index
    %c0_35 = arith.constant 0 : index
    %c0_36 = arith.constant 0 : index
    %75 = vector.load %arg8[%c0_34, %c0_35, %c0_36] : memref<1x256x128xbf16, #tpu.memory_space<vmem>>, vector<1x256x128xbf16>
    %76 = vector.shape_cast %75 : vector<1x256x128xbf16> to vector<256x128xbf16>
    %cst_37 = arith.constant dense<0.000000e+00> : vector<16x128xf32>
    %77 = tpu.matmul %74, %76, %cst_37 {dimension_numbers = #tpu.dot_dimension_numbers<[1], [0], [0], [1], [0, 0, 1, 1], [], []>} : vector<16x256xbf16>, vector<256x128xbf16>, vector<16x128xf32> -> vector<16x128xf32>
    %c0_38 = arith.constant 0 : index
    %c0_39 = arith.constant 0 : index
    %c0_40 = arith.constant 0 : index
    %78 = vector.load %arg9[%c0_38, %c0_39, %c0_40] : memref<1x1x128xf32, #tpu.memory_space<vmem>>, vector<1x1x128xf32>
    %79 = vector.shape_cast %78 : vector<1x1x128xf32> to vector<1x128xf32>
    %80 = vector.broadcast %79 : vector<1x128xf32> to vector<16x128xf32>
    %81 = arith.addf %77, %80 : vector<16x128xf32>
    %82 = arith.addf %81, %63 : vector<16x128xf32>
    %83 = arith.mulf %82, %82 : vector<16x128xf32>
    %cst_41 = arith.constant dense<0.000000e+00> : vector<128xf32>
    %84 = vector.multi_reduction <add>, %83, %cst_41 [0] : vector<16x128xf32> to vector<128xf32>
    %85 = vector.shape_cast %84 : vector<128xf32> to vector<1x128xf32>
    %cst_42 = arith.constant 1.000000e-24 : f32
    %86 = vector.broadcast %cst_42 : f32 to vector<1x128xf32>
    %87 = arith.maximumf %85, %86 : vector<1x128xf32>
    %88 = math.rsqrt %87 : vector<1x128xf32>
    %89 = vector.broadcast %88 : vector<1x128xf32> to vector<16x128xf32>
    %90 = arith.mulf %82, %89 : vector<16x128xf32>
    %c0_43 = arith.constant 0 : index
    %c0_44 = arith.constant 0 : index
    %c0_45 = arith.constant 0 : index
    %91 = vector.load %arg10[%c0_43, %c0_44, %c0_45] : memref<1x16x128xf32, #tpu.memory_space<vmem>>, vector<1x16x128xf32>
    %92 = vector.shape_cast %91 : vector<1x16x128xf32> to vector<16x128xf32>
    %93 = vector.shape_cast %90 : vector<16x128xf32> to vector<1x16x128xf32>
    tpu.vector_store %arg10[%c0_43, %c0_44, %c0_45], %93 {strides = array<i32>} : memref<1x16x128xf32, #tpu.memory_space<vmem>>, vector<1x16x128xf32>,
    return
  }
  func.func @transform_0(%arg0: i32, %arg1: i32) -> (i32, i32, i32) {
    %c0_i32 = arith.constant 0 : i32
    %c0_i32_0 = arith.constant 0 : i32
    %c0_i32_1 = arith.constant 0 : i32
    return %arg0, %c0_i32, %c0_i32_0 : i32, i32, i32
  }
  func.func @transform_1(%arg0: i32, %arg1: i32) -> (i32, i32, i32) {
    %c0_i32 = arith.constant 0 : i32
    %c0_i32_0 = arith.constant 0 : i32
    %c0_i32_1 = arith.constant 0 : i32
    return %arg1, %c0_i32, %c0_i32_0 : i32, i32, i32
  }
  func.func @transform_2(%arg0: i32, %arg1: i32) -> (i32, i32, i32) {
    %c0_i32 = arith.constant 0 : i32
    %c0_i32_0 = arith.constant 0 : i32
    %c0_i32_1 = arith.constant 0 : i32
    return %arg1, %c0_i32, %c0_i32_0 : i32, i32, i32
  }
  func.func @transform_3(%arg0: i32, %arg1: i32) -> (i32, i32, i32) {
    %c0_i32 = arith.constant 0 : i32
    %c0_i32_0 = arith.constant 0 : i32
    %c0_i32_1 = arith.constant 0 : i32
    return %arg1, %c0_i32, %c0_i32_0 : i32, i32, i32
  }
  func.func @transform_4(%arg0: i32, %arg1: i32) -> (i32, i32, i32) {
    %c0_i32 = arith.constant 0 : i32
    %c0_i32_0 = arith.constant 0 : i32
    %c0_i32_1 = arith.constant 0 : i32
    return %arg1, %c0_i32, %c0_i32_0 : i32, i32, i32
  }
  func.func @transform_5(%arg0: i32, %arg1: i32) -> (i32, i32, i32) {
    %c0_i32 = arith.constant 0 : i32
    %c0_i32_0 = arith.constant 0 : i32
    %c0_i32_1 = arith.constant 0 : i32
    return %arg1, %c0_i32, %c0_i32_0 : i32, i32, i32
  }
  func.func @transform_6(%arg0: i32, %arg1: i32) -> (i32, i32, i32) {
    %c0_i32 = arith.constant 0 : i32
    %c0_i32_0 = arith.constant 0 : i32
    %c0_i32_1 = arith.constant 0 : i32
    return %arg1, %c0_i32, %c0_i32_0 : i32, i32, i32
  }
  func.func @transform_7(%arg0: i32, %arg1: i32) -> (i32, i32, i32) {
    %c0_i32 = arith.constant 0 : i32
    %c0_i32_0 = arith.constant 0 : i32
    %c0_i32_1 = arith.constant 0 : i32
    return %arg1, %c0_i32, %c0_i32_0 : i32, i32, i32
  }
  func.func @transform_8(%arg0: i32, %arg1: i32) -> (i32, i32, i32) {
    %c0_i32 = arith.constant 0 : i32
    %c0_i32_0 = arith.constant 0 : i32
    %c0_i32_1 = arith.constant 0 : i32
    return %arg0, %c0_i32, %c0_i32_0 : i32, i32, i32
  }
}

</mosaic_0001>

<llo_original>
// kernel: encoder.1
$region0: #{encoder.1}
  #allocation0 [shape = 'u32[]', space=smem, size = 0x4, offset = 0x4, fixed_abs, tag = 'smem constant byte address 0x4 - core index']
  #allocation1 [shape = 'u32[144,128]{1,0:T(1,128)}', space=vmem, size = 0x12000, scoped, tag = 'internal scratch']
  %s0 = inlined_call_operand.hbm [shape: f32[2,16,128], index: 0, kind: input, shape index: {}]
  %s1 = inlined_call_operand.hbm [shape: bf16[2,128,384], index: 1, kind: input, shape index: {}]
  %s2 = inlined_call_operand.hbm [shape: bf16[2,128,128], index: 2, kind: input, shape index: {}]
  %s3 = inlined_call_operand.vmem [shape: f32[2,1,128], index: 3, kind: input, shape index: {}]
  %s4 = inlined_call_operand.hbm [shape: bf16[2,128,256], index: 4, kind: input, shape index: {}]
  %s5 = inlined_call_operand.hbm [shape: f32[2,1,256], index: 5, kind: input, shape index: {}]
  %s6 = inlined_call_operand.hbm [shape: bf16[2,256,128], index: 6, kind: input, shape index: {}]
  %s7 = inlined_call_operand.hbm [shape: f32[2,1,128], index: 7, kind: input, shape index: {}]
  %s8 = inlined_call_operand.hbm [shape: f32[2,16,128], index: 8, kind: output, shape index: {}]
  %s9 = sld [smem:[#allocation0]]
  $region97: #{encoder.1} parent=0
    _
  %s11 = ssub.s32 1, %s9
  %s12 = scalar_select 0, %s11, %s9
  $region1: #{encoder.1} parent=0
    #allocation2 [shape = 'u8[16384]{0}', space=vmem, size = 0x4000, scoped, tag = 'input window, operand 0']
    #allocation3 [shape = 's32[2]{0}', space=sflag, size = 0x8, scoped, tag = 'scoped memory for encoder.1']
    #allocation4 [shape = 's32[2]{0}', space=sflag, size = 0x8, scoped, tag = 'scoped memory for encoder.1']
    #allocation5 [shape = 'u8[196608]{0}', space=vmem, size = 0x30000, scoped, tag = 'input window, operand 1']
    #allocation6 [shape = 's32[2]{0}', space=sflag, size = 0x8, scoped, tag = 'scoped memory for encoder.1']
    #allocation7 [shape = 'u8[65536]{0}', space=vmem, size = 0x10000, scoped, tag = 'input window, operand 2']
    #allocation8 [shape = 'u8[131072]{0}', space=vmem, size = 0x20000, scoped, tag = 'input window, operand 4']
    #allocation9 [shape = 's32[2]{0}', space=sflag, size = 0x8, scoped, tag = 'scoped memory for encoder.1']
    #allocation10 [shape = 'u8[2048]{0}', space=vmem, size = 0x800, scoped, tag = 'input window, operand 5']
    #allocation11 [shape = 'u8[131072]{0}', space=vmem, size = 0x20000, scoped, tag = 'input window, operand 6']
    #allocation12 [shape = 's32[2]{0}', space=sflag, size = 0x8, scoped, tag = 'scoped memory for encoder.1']
    #allocation13 [shape = 'u8[1024]{0}', space=vmem, size = 0x400, scoped, tag = 'input window, operand 7']
    #allocation14 [shape = 'u8[16384]{0}', space=vmem, size = 0x4000, scoped, tag = 'output window, operand 0']
    %13 = vsyncpa [#allocation3], 0
    %s14 = scalar_lea.sflag [#allocation3], 1
    %15 = vsyncpa %s14, 0
    %16 = vsyncpa [#allocation6], 0
    %s17 = scalar_lea.sflag [#allocation6], 1
    %18 = vsyncpa %s17, 0
    %19 = vsyncpa [#allocation9], 0
    %s20 = scalar_lea.sflag [#allocation9], 1
    %21 = vsyncpa %s20, 0
    %22 = vsyncpa [#allocation12], 0
    %s23 = scalar_lea.sflag [#allocation12], 1
    %24 = vsyncpa %s23, 0
    %25 = vsyncpa [#allocation4], 0
    %s26 = scalar_lea.sflag [#allocation4], 1
    %27 = vsyncpa %s26, 0
    loop: start=0, step=1, limit=6
    $region2: #{encoder.1} parent=1 // loop_pre_header
      _
    $region3: #{encoder.1} parent=1 // loop_header
      %s29 = sphi 0, %s33
      %p30 = scmp.ge.s32.totalorder %s29, 6
      %s36 = sphi 0, %s48
      %s37 = sphi 0, %s44
      %s38 = sphi 0, %s36
      %s39 = sphi 0, %s37
      %s40 = sphi 0, %s38
      %s41 = sphi 0, %s39
      %s51 = sphi 0, %s53
      %s54 = sphi 0, %s51
      %s55 = sphi 0, %s54
      %s71 = sphi 0, %s55
      %s77 = sphi 0, %s79
      %s80 = sphi 0, %s77
      %s81 = sphi 0, %s80
      %s97 = sphi 0, %s81
      %s103 = sphi 0, %s105
      %s106 = sphi 0, %s103
      %s107 = sphi 0, %s106
      %s123 = sphi 0, %s107
      %s129 = sphi 0, %s131
      %s132 = sphi 0, %s129
      %s133 = sphi 0, %s132
      %s149 = sphi 0, %s133
      %s155 = sphi 0, %s157
      %s158 = sphi 0, %s155
      %s159 = sphi 0, %s158
      %s175 = sphi 0, %s159
      %s181 = sphi 0, %s183
      %s184 = sphi 0, %s181
      %s185 = sphi 0, %s184
      %s201 = sphi 0, %s185
      %s207 = sphi 0, %s209
      %s210 = sphi 0, %s207
      %s211 = sphi 0, %s210
      %s227 = sphi 0, %s211
      %s233 = sphi 0, %s235
      %s236 = sphi 0, %s233
      %s237 = sphi 0, %s236
      %s253 = sphi 0, %s237
      %s259 = sphi 0, %s261
      %s262 = sphi 0, %s259
      %s263 = sphi 0, %s262
      %s279 = sphi 0, %s263
    $region4: #{encoder.1} parent=1 // loop_header_branch
      %32 = sbr.rel (%p30) target = $region8
    $region5: #{encoder.1} parent=1 // loop_body
      %s34 = ssub.s32 %s29, 1
      %s35 = ssub.s32 %s29, 2
      %s42 = sadd.s32 1, %s37
      %p43 = scmp.ge.s32.totalorder %s42, 2
      %s44 = scalar_select %p43, 0, %s42
      %s45 = sadd.s32 1, %s36
      %s46 = scalar_select %p43, %s45, %s36
      %p47 = scmp.ge.s32.totalorder %s46, 2
      %s48 = scalar_select %p47, 0, %s46
      %s49 = ssub.s32 %s36, %s48
      %p50 = scmp.eq.s32.totalorder %s49, 0
      %s52 = sadd.s32 %s51, 1
      %s53 = scalar_select %p50, %s51, %s52
      %p56 = pneg %p50
      %p57 = scmp.eq.s32.totalorder %s29, 3
      %p58 = por %p56, %p57
      %p59 = scmp.ne.s32.totalorder %s51, %s54
      %p60 = scmp.eq.s32.totalorder %s29, 0
      %p61 = por %p59, %p60
      %p62 = scmp.ne.s32.totalorder %s51, %s54
      %p63 = scmp.eq.s32.totalorder %s34, 3
      %p64 = por %p62, %p63
      %p65 = scmp.ne.s32.totalorder %s54, %s55
      %p66 = scmp.eq.s32.totalorder %s34, 0
      %p67 = por %p65, %p66
      %p68 = scmp.ne.s32.totalorder %s54, %s55
      %p69 = scmp.eq.s32.totalorder %s35, 3
      %p70 = por %p68, %p69
      %p72 = scmp.ne.s32.totalorder %s55, %s71
      %p73 = scmp.eq.s32.totalorder %s35, 0
      %p74 = por %p72, %p73
      %s75 = ssub.s32 %s37, %s44
      %p76 = scmp.eq.s32.totalorder %s75, 0
      %s78 = sadd.s32 %s77, 1
      %s79 = scalar_select %p76, %s77, %s78
      %p82 = pneg %p76
      %p83 = scmp.eq.s32.totalorder %s29, 3
      %p84 = por %p82, %p83
      %p85 = scmp.ne.s32.totalorder %s77, %s80
      %p86 = scmp.eq.s32.totalorder %s29, 0
      %p87 = por %p85, %p86
      %p88 = scmp.ne.s32.totalorder %s77, %s80
      %p89 = scmp.eq.s32.totalorder %s34, 3
      %p90 = por %p88, %p89
      %p91 = scmp.ne.s32.totalorder %s80, %s81
      %p92 = scmp.eq.s32.totalorder %s34, 0
      %p93 = por %p91, %p92
      %p94 = scmp.ne.s32.totalorder %s80, %s81
      %p95 = scmp.eq.s32.totalorder %s35, 3
      %p96 = por %p94, %p95
      %p98 = scmp.ne.s32.totalorder %s81, %s97
      %p99 = scmp.eq.s32.totalorder %s35, 0
      %p100 = por %p98, %p99
      %s101 = ssub.s32 %s37, %s44
      %p102 = scmp.eq.s32.totalorder %s101, 0
      %s104 = sadd.s32 %s103, 1
      %s105 = scalar_select %p102, %s103, %s104
      %p108 = pneg %p102
      %p109 = scmp.eq.s32.totalorder %s29, 3
      %p110 = por %p108, %p109
      %p111 = scmp.ne.s32.totalorder %s103, %s106
      %p112 = scmp.eq.s32.totalorder %s29, 0
      %p113 = por %p111, %p112
      %p114 = scmp.ne.s32.totalorder %s103, %s106
      %p115 = scmp.eq.s32.totalorder %s34, 3
      %p116 = por %p114, %p115
      %p117 = scmp.ne.s32.totalorder %s106, %s107
      %p118 = scmp.eq.s32.totalorder %s34, 0
      %p119 = por %p117, %p118
      %p120 = scmp.ne.s32.totalorder %s106, %s107
      %p121 = scmp.eq.s32.totalorder %s35, 3
      %p122 = por %p120, %p121
      %p124 = scmp.ne.s32.totalorder %s107, %s123
      %p125 = scmp.eq.s32.totalorder %s35, 0
      %p126 = por %p124, %p125
      %s127 = ssub.s32 %s37, %s44
      %p128 = scmp.eq.s32.totalorder %s127, 0
      %s130 = sadd.s32 %s129, 1
      %s131 = scalar_select %p128, %s129, %s130
      %p134 = pneg %p128
      %p135 = scmp.eq.s32.totalorder %s29, 3
      %p136 = por %p134, %p135
      %p137 = scmp.ne.s32.totalorder %s129, %s132
      %p138 = scmp.eq.s32.totalorder %s29, 0
      %p139 = por %p137, %p138
      %p140 = scmp.ne.s32.totalorder %s129, %s132
      %p141 = scmp.eq.s32.totalorder %s34, 3
      %p142 = por %p140, %p141
      %p143 = scmp.ne.s32.totalorder %s132, %s133
      %p144 = scmp.eq.s32.totalorder %s34, 0
      %p145 = por %p143, %p144
      %p146 = scmp.ne.s32.totalorder %s132, %s133
      %p147 = scmp.eq.s32.totalorder %s35, 3
      %p148 = por %p146, %p147
      %p150 = scmp.ne.s32.totalorder %s133, %s149
      %p151 = scmp.eq.s32.totalorder %s35, 0
      %p152 = por %p150, %p151
      %s153 = ssub.s32 %s37, %s44
      %p154 = scmp.eq.s32.totalorder %s153, 0
      %s156 = sadd.s32 %s155, 1
      %s157 = scalar_select %p154, %s155, %s156
      %p160 = pneg %p154
      %p161 = scmp.eq.s32.totalorder %s29, 3
      %p162 = por %p160, %p161
      %p163 = scmp.ne.s32.totalorder %s155, %s158
      %p164 = scmp.eq.s32.totalorder %s29, 0
      %p165 = por %p163, %p164
      %p166 = scmp.ne.s32.totalorder %s155, %s158
      %p167 = scmp.eq.s32.totalorder %s34, 3
      %p168 = por %p166, %p167
      %p169 = scmp.ne.s32.totalorder %s158, %s159
      %p170 = scmp.eq.s32.totalorder %s34, 0
      %p171 = por %p169, %p170
      %p172 = scmp.ne.s32.totalorder %s158, %s159
      %p173 = scmp.eq.s32.totalorder %s35, 3
      %p174 = por %p172, %p173
      %p176 = scmp.ne.s32.totalorder %s159, %s175
      %p177 = scmp.eq.s32.totalorder %s35, 0
      %p178 = por %p176, %p177
      %s179 = ssub.s32 %s37, %s44
      %p180 = scmp.eq.s32.totalorder %s179, 0
      %s182 = sadd.s32 %s181, 1
      %s183 = scalar_select %p180, %s181, %s182
      %p186 = pneg %p180
      %p187 = scmp.eq.s32.totalorder %s29, 3
      %p188 = por %p186, %p187
      %p189 = scmp.ne.s32.totalorder %s181, %s184
      %p190 = scmp.eq.s32.totalorder %s29, 0
      %p191 = por %p189, %p190
      %p192 = scmp.ne.s32.totalorder %s181, %s184
      %p193 = scmp.eq.s32.totalorder %s34, 3
      %p194 = por %p192, %p193
      %p195 = scmp.ne.s32.totalorder %s184, %s185
      %p196 = scmp.eq.s32.totalorder %s34, 0
      %p197 = por %p195, %p196
      %p198 = scmp.ne.s32.totalorder %s184, %s185
      %p199 = scmp.eq.s32.totalorder %s35, 3
      %p200 = por %p198, %p199
      %p202 = scmp.ne.s32.totalorder %s185, %s201
      %p203 = scmp.eq.s32.totalorder %s35, 0
      %p204 = por %p202, %p203
      %s205 = ssub.s32 %s37, %s44
      %p206 = scmp.eq.s32.totalorder %s205, 0
      %s208 = sadd.s32 %s207, 1
      %s209 = scalar_select %p206, %s207, %s208
      %p212 = pneg %p206
      %p213 = scmp.eq.s32.totalorder %s29, 3
      %p214 = por %p212, %p213
      %p215 = scmp.ne.s32.totalorder %s207, %s210
      %p216 = scmp.eq.s32.totalorder %s29, 0
      %p217 = por %p215, %p216
      %p218 = scmp.ne.s32.totalorder %s207, %s210
      %p219 = scmp.eq.s32.totalorder %s34, 3
      %p220 = por %p218, %p219
      %p221 = scmp.ne.s32.totalorder %s210, %s211
      %p222 = scmp.eq.s32.totalorder %s34, 0
      %p223 = por %p221, %p222
      %p224 = scmp.ne.s32.totalorder %s210, %s211
      %p225 = scmp.eq.s32.totalorder %s35, 3
      %p226 = por %p224, %p225
      %p228 = scmp.ne.s32.totalorder %s211, %s227
      %p229 = scmp.eq.s32.totalorder %s35, 0
      %p230 = por %p228, %p229
      %s231 = ssub.s32 %s37, %s44
      %p232 = scmp.eq.s32.totalorder %s231, 0
      %s234 = sadd.s32 %s233, 1
      %s235 = scalar_select %p232, %s233, %s234
      %p238 = pneg %p232
      %p239 = scmp.eq.s32.totalorder %s29, 3
      %p240 = por %p238, %p239
      %p241 = scmp.ne.s32.totalorder %s233, %s236
      %p242 = scmp.eq.s32.totalorder %s29, 0
      %p243 = por %p241, %p242
      %p244 = scmp.ne.s32.totalorder %s233, %s236
      %p245 = scmp.eq.s32.totalorder %s34, 3
      %p246 = por %p244, %p245
      %p247 = scmp.ne.s32.totalorder %s236, %s237
      %p248 = scmp.eq.s32.totalorder %s34, 0
      %p249 = por %p247, %p248
      %p250 = scmp.ne.s32.totalorder %s236, %s237
      %p251 = scmp.eq.s32.totalorder %s35, 3
      %p252 = por %p250, %p251
      %p254 = scmp.ne.s32.totalorder %s237, %s253
      %p255 = scmp.eq.s32.totalorder %s35, 0
      %p256 = por %p254, %p255
      %s257 = ssub.s32 %s36, %s48
      %p258 = scmp.eq.s32.totalorder %s257, 0
      %s260 = sadd.s32 %s259, 1
      %s261 = scalar_select %p258, %s259, %s260
      %p264 = pneg %p258
      %p265 = scmp.eq.s32.totalorder %s29, 3
      %p266 = por %p264, %p265
      %p267 = scmp.ne.s32.totalorder %s259, %s262
      %p268 = scmp.eq.s32.totalorder %s29, 0
      %p269 = por %p267, %p268
      %p270 = scmp.ne.s32.totalorder %s259, %s262
      %p271 = scmp.eq.s32.totalorder %s34, 3
      %p272 = por %p270, %p271
      %p273 = scmp.ne.s32.totalorder %s262, %s263
      %p274 = scmp.eq.s32.totalorder %s34, 0
      %p275 = por %p273, %p274
      %p276 = scmp.ne.s32.totalorder %s262, %s263
      %p277 = scmp.eq.s32.totalorder %s35, 3
      %p278 = por %p276, %p277
      %p280 = scmp.ne.s32.totalorder %s263, %s279
      %p281 = scmp.eq.s32.totalorder %s35, 0
      %p282 = por %p280, %p281
      %p283 = scmp.le.s32.totalorder 1, %s29
      %p284 = scmp.lt.s32.totalorder %s29, 5
      %p285 = pnand %p283, %p284
      %p286 = pneg %p285
      // Predicated region
      $region9: #{encoder.1} parent=5 // pred_check
        _
      $region10: #{encoder.1} parent=5 // pred_check_branch
        %288 = sbr.rel (%p285) target = $region12
      $region11: #{encoder.1} parent=5 // pred_region
        %s289 = ssub.s32 %s29, 1
      $region12: #{encoder.1} parent=5 // pred_fallthru
        _
      %p290 = scmp.lt.s32.totalorder %s29, 4
      // Predicated region
      $region13: #{encoder.1} parent=5 // pred_check
        %p291 = pneg %p290
      $region14: #{encoder.1} parent=5 // pred_check_branch
        %293 = sbr.rel (%p291) target = $region16
      $region15: #{encoder.1} parent=5 // pred_region
        // Predicated region
        $region17: #{encoder.1} parent=15 // pred_check
          %p294 = pneg %p61
        $region18: #{encoder.1} parent=15 // pred_check_branch
          %296 = sbr.rel (%p294) target = $region20
        $region19: #{encoder.1} parent=15 // pred_region
          %s297 = sand.u32 %s51, 1
          %s298 = scalar_lea.sflag [#allocation3], %s297
          %s299 = sand.u32 %s51, 1
          %s300 = smul.addr %s299, 16
          %s301 = scalar_lea.vmem [#allocation2], %s300
          %s303 = ssub.s32 256, 256
          %304 = vsyncadd %s298, %s303
          %s305 = smul.addr %s36, 2
          %s306 = smul.addr %s305, 128
          %s307 = scalar_lea.hbm %s0, %s306
          %s308 = sshll.u32 %s301, 4
          %s309 = int_to_ptr.vmem [resolvable:$true] %s308
          %314 = dma.hbm_to_vmem [thread:$0]  %s307, 256, %s309, %s298, 128, 128, 8
        $region20: #{encoder.1} parent=15 // pred_fallthru
          _
        // Predicated region
        $region21: #{encoder.1} parent=15 // pred_check
          %p315 = pneg %p87
        $region22: #{encoder.1} parent=15 // pred_check_branch
          %317 = sbr.rel (%p315) target = $region24
        $region23: #{encoder.1} parent=15 // pred_region
          %s318 = sand.u32 %s29, 1
          %s319 = scalar_lea.sflag [#allocation6], %s318
          %s320 = sand.u32 %s77, 1
          %s321 = smul.addr %s320, 192
          %s322 = scalar_lea.vmem [#allocation5], %s321
          %s324 = ssub.s32 3072, 3072
          %325 = vsyncadd %s319, %s324
          %s326 = smul.addr %s37, 48
          %s327 = smul.addr %s326, 64
          %s328 = scalar_lea.hbm %s1, %s327
          %s329 = sshll.u32 %s322, 4
          %s330 = int_to_ptr.vmem [resolvable:$true] %s329
          %335 = dma.hbm_to_vmem [thread:$0]  %s328, 3072, %s330, %s319, 192, 192, 12
        $region24: #{encoder.1} parent=15 // pred_fallthru
          _
        // Predicated region
        $region25: #{encoder.1} parent=15 // pred_check
          %p336 = pneg %p113
        $region26: #{encoder.1} parent=15 // pred_check_branch
          %338 = sbr.rel (%p336) target = $region28
        $region27: #{encoder.1} parent=15 // pred_region
          %s339 = sand.u32 %s29, 1
          %s340 = scalar_lea.sflag [#allocation6], %s339
          %s341 = sand.u32 %s103, 1
          %s342 = smul.addr %s341, 64
          %s343 = scalar_lea.vmem [#allocation7], %s342
          %s345 = ssub.s32 1024, 1024
          %346 = vsyncadd %s340, %s345
          %s347 = smul.addr %s37, 16
          %s348 = smul.addr %s347, 64
          %s349 = scalar_lea.hbm %s2, %s348
          %s350 = sshll.u32 %s343, 4
          %s351 = int_to_ptr.vmem [resolvable:$true] %s350
          %356 = dma.hbm_to_vmem [thread:$0]  %s349, 1024, %s351, %s340, 64, 64, 4
        $region28: #{encoder.1} parent=15 // pred_fallthru
          _
        // Predicated region
        $region29: #{encoder.1} parent=15 // pred_check
          %p357 = pneg %p139
        $region30: #{encoder.1} parent=15 // pred_check_branch
          %359 = sbr.rel (%p357) target = $region32
        $region31: #{encoder.1} parent=15 // pred_region
          %p360 = scmp.lt.s32.totalorder %s37, 1
          %s361 = scalar_select %p360, %s37, 1
          %s362 = scalar_lea.vmem %s3, %s361
        $region32: #{encoder.1} parent=15 // pred_fallthru
          _
        // Predicated region
        $region33: #{encoder.1} parent=15 // pred_check
          %p363 = pneg %p165
        $region34: #{encoder.1} parent=15 // pred_check_branch
          %365 = sbr.rel (%p363) target = $region36
        $region35: #{encoder.1} parent=15 // pred_region
          %s366 = sand.u32 %s29, 1
          %s367 = scalar_lea.sflag [#allocation9], %s366
          %s368 = sand.u32 %s155, 1
          %s369 = smul.addr %s368, 128
          %s370 = scalar_lea.vmem [#allocation8], %s369
          %s372 = ssub.s32 2048, 2048
          %373 = vsyncadd %s367, %s372
          %s374 = smul.addr %s37, 32
          %s375 = smul.addr %s374, 64
          %s376 = scalar_lea.hbm %s4, %s375
          %s377 = sshll.u32 %s370, 4
          %s378 = int_to_ptr.vmem [resolvable:$true] %s377
          %383 = dma.hbm_to_vmem [thread:$0]  %s376, 2048, %s378, %s367, 128, 128, 8
        $region36: #{encoder.1} parent=15 // pred_fallthru
          _
        // Predicated region
        $region37: #{encoder.1} parent=15 // pred_check
          %p384 = pneg %p191
        $region38: #{encoder.1} parent=15 // pred_check_branch
          %386 = sbr.rel (%p384) target = $region40
        $region39: #{encoder.1} parent=15 // pred_region
          %s387 = sand.u32 %s29, 1
          %s388 = scalar_lea.sflag [#allocation9], %s387
          %s389 = sand.u32 %s181, 1
          %s390 = smul.addr %s389, 2
          %s391 = scalar_lea.vmem [#allocation10], %s390
          %s393 = ssub.s32 32, 32
          %394 = vsyncadd %s388, %s393
          %s395 = smul.addr %s37, 2
          %s396 = smul.addr %s395, 16
          %s397 = scalar_lea.hbm %s5, %s396
          %s399 = sshll.u32 %s391, 4
          %s400 = int_to_ptr.vmem [resolvable:$true] %s399
          %402 = dma.hbm_to_vmem [thread:$0]  %s397, 32, %s400, %s388
        $region40: #{encoder.1} parent=15 // pred_fallthru
          _
        // Predicated region
        $region41: #{encoder.1} parent=15 // pred_check
          %p403 = pneg %p217
        $region42: #{encoder.1} parent=15 // pred_check_branch
          %405 = sbr.rel (%p403) target = $region44
        $region43: #{encoder.1} parent=15 // pred_region
          %s406 = sand.u32 %s29, 1
          %s407 = scalar_lea.sflag [#allocation12], %s406
          %s408 = sand.u32 %s207, 1
          %s409 = smul.addr %s408, 128
          %s410 = scalar_lea.vmem [#allocation11], %s409
          %s412 = ssub.s32 2048, 2048
          %413 = vsyncadd %s407, %s412
          %s414 = smul.addr %s37, 32
          %s415 = smul.addr %s414, 64
          %s416 = scalar_lea.hbm %s6, %s415
          %s417 = sshll.u32 %s410, 4
          %s418 = int_to_ptr.vmem [resolvable:$true] %s417
          %423 = dma.hbm_to_vmem [thread:$0]  %s416, 2048, %s418, %s407, 64, 64, 4
        $region44: #{encoder.1} parent=15 // pred_fallthru
          _
        // Predicated region
        $region45: #{encoder.1} parent=15 // pred_check
          %p424 = pneg %p243
        $region46: #{encoder.1} parent=15 // pred_check_branch
          %426 = sbr.rel (%p424) target = $region48
        $region47: #{encoder.1} parent=15 // pred_region
          %s427 = sand.u32 %s29, 1
          %s428 = scalar_lea.sflag [#allocation12], %s427
          %s429 = sand.u32 %s233, 1
          %s430 = scalar_lea.vmem [#allocation13], %s429
          %s432 = ssub.s32 16, 16
          %433 = vsyncadd %s428, %s432
          %s434 = smul.addr %s37, 16
          %s435 = scalar_lea.hbm %s7, %s434
          %s437 = sshll.u32 %s430, 4
          %s438 = int_to_ptr.vmem [resolvable:$true] %s437
          %440 = dma.hbm_to_vmem [thread:$0]  %s435, 16, %s438, %s428
        $region48: #{encoder.1} parent=15 // pred_fallthru
          _
      $region16: #{encoder.1} parent=5 // pred_fallthru
        _
      %p441 = scmp.le.s32.totalorder 1, %s29
      %p442 = scmp.lt.s32.totalorder %s29, 5
      %p443 = pnand %p441, %p442
      %p444 = pneg %p443
      // Predicated region
      $region49: #{encoder.1} parent=5 // pred_check
        _
      $region50: #{encoder.1} parent=5 // pred_check_branch
        %446 = sbr.rel (%p443) target = $region52
      $region51: #{encoder.1} parent=5 // pred_region
        %s447 = ssub.s32 %s29, 1
        %s448 = sand.u32 %s54, 1
        %s449 = scalar_lea.sflag [#allocation3], %s448
        %s450 = sand.u32 %s54, 1
        %s451 = smul.addr %s450, 16
        %s452 = scalar_lea.vmem [#allocation2], %s451
        // Predicated region
        $region53: #{encoder.1} parent=51 // pred_check
          %p453 = pneg %p67
        $region54: #{encoder.1} parent=51 // pred_check_branch
          %455 = sbr.rel (%p453) target = $region56
        $region55: #{encoder.1} parent=51 // pred_region
          %456 = dma.done %s449, 256
        $region56: #{encoder.1} parent=51 // pred_fallthru
          _
        %s457 = sand.u32 %s34, 1
        %s458 = scalar_lea.sflag [#allocation6], %s457
        %s459 = sand.u32 %s80, 1
        %s460 = smul.addr %s459, 192
        %s461 = scalar_lea.vmem [#allocation5], %s460
        // Predicated region
        $region57: #{encoder.1} parent=51 // pred_check
          %p462 = pneg %p93
        $region58: #{encoder.1} parent=51 // pred_check_branch
          %464 = sbr.rel (%p462) target = $region60
        $region59: #{encoder.1} parent=51 // pred_region
          %465 = dma.done %s458, 3072
        $region60: #{encoder.1} parent=51 // pred_fallthru
          _
        %s466 = sand.u32 %s34, 1
        %s467 = scalar_lea.sflag [#allocation6], %s466
        %s468 = sand.u32 %s106, 1
        %s469 = smul.addr %s468, 64
        %s470 = scalar_lea.vmem [#allocation7], %s469
        // Predicated region
        $region61: #{encoder.1} parent=51 // pred_check
          %p471 = pneg %p119
        $region62: #{encoder.1} parent=51 // pred_check_branch
          %473 = sbr.rel (%p471) target = $region64
        $region63: #{encoder.1} parent=51 // pred_region
          %474 = dma.done %s467, 1024
        $region64: #{encoder.1} parent=51 // pred_fallthru
          _
        %s475 = sand.u32 %s34, 1
        %s476 = scalar_lea.sflag [#allocation9], %s475
        %s477 = sand.u32 %s158, 1
        %s478 = smul.addr %s477, 128
        %s479 = scalar_lea.vmem [#allocation8], %s478
        // Predicated region
        $region65: #{encoder.1} parent=51 // pred_check
          %p480 = pneg %p171
        $region66: #{encoder.1} parent=51 // pred_check_branch
          %482 = sbr.rel (%p480) target = $region68
        $region67: #{encoder.1} parent=51 // pred_region
          %483 = dma.done %s476, 2048
        $region68: #{encoder.1} parent=51 // pred_fallthru
          _
        %s484 = sand.u32 %s34, 1
        %s485 = scalar_lea.sflag [#allocation9], %s484
        %s486 = sand.u32 %s184, 1
        %s487 = smul.addr %s486, 2
        %s488 = scalar_lea.vmem [#allocation10], %s487
        // Predicated region
        $region69: #{encoder.1} parent=51 // pred_check
          %p489 = pneg %p197
        $region70: #{encoder.1} parent=51 // pred_check_branch
          %491 = sbr.rel (%p489) target = $region72
        $region71: #{encoder.1} parent=51 // pred_region
          %492 = dma.done %s485, 32
        $region72: #{encoder.1} parent=51 // pred_fallthru
          _
        %s493 = sand.u32 %s34, 1
        %s494 = scalar_lea.sflag [#allocation12], %s493
        %s495 = sand.u32 %s210, 1
        %s496 = smul.addr %s495, 128
        %s497 = scalar_lea.vmem [#allocation11], %s496
        // Predicated region
        $region73: #{encoder.1} parent=51 // pred_check
          %p498 = pneg %p223
        $region74: #{encoder.1} parent=51 // pred_check_branch
          %500 = sbr.rel (%p498) target = $region76
        $region75: #{encoder.1} parent=51 // pred_region
          %501 = dma.done %s494, 2048
        $region76: #{encoder.1} parent=51 // pred_fallthru
          _
        %s502 = sand.u32 %s34, 1
        %s503 = scalar_lea.sflag [#allocation12], %s502
        %s504 = sand.u32 %s236, 1
        %s505 = scalar_lea.vmem [#allocation13], %s504
        // Predicated region
        $region77: #{encoder.1} parent=51 // pred_check
          %p506 = pneg %p249
        $region78: #{encoder.1} parent=51 // pred_check_branch
          %508 = sbr.rel (%p506) target = $region80
        $region79: #{encoder.1} parent=51 // pred_region
          %509 = dma.done %s503, 16
        $region80: #{encoder.1} parent=51 // pred_fallthru
          _
        %s510 = sand.u32 %s54, 1
        %s511 = scalar_lea.sflag [#allocation3], %s510
        %s512 = sand.u32 %s54, 1
        %s513 = smul.addr %s512, 16
        %s514 = scalar_lea.vmem [#allocation2], %s513
        %p515 = pneg %p67
        %p516 = pneg %p64
        %s517 = sand.u32 %s34, 1
        %s518 = scalar_lea.sflag [#allocation6], %s517
        %s519 = sand.u32 %s80, 1
        %s520 = smul.addr %s519, 192
        %s521 = scalar_lea.vmem [#allocation5], %s520
        %p522 = pneg %p93
        %p523 = pneg %p90
        %s524 = sand.u32 %s34, 1
        %s525 = scalar_lea.sflag [#allocation6], %s524
        %s526 = sand.u32 %s106, 1
        %s527 = smul.addr %s526, 64
        %s528 = scalar_lea.vmem [#allocation7], %s527
        %p529 = pneg %p119
        %p530 = pneg %p116
        %p531 = scmp.lt.s32.totalorder %s39, 1
        %s532 = scalar_select %p531, %s39, 1
        %s533 = scalar_lea.vmem %s3, %s532
        %p534 = pneg %p145
        %p535 = pneg %p142
        %s536 = sand.u32 %s34, 1
        %s537 = scalar_lea.sflag [#allocation9], %s536
        %s538 = sand.u32 %s158, 1
        %s539 = smul.addr %s538, 128
        %s540 = scalar_lea.vmem [#allocation8], %s539
        %p541 = pneg %p171
        %p542 = pneg %p168
        %s543 = sand.u32 %s34, 1
        %s544 = scalar_lea.sflag [#allocation9], %s543
        %s545 = sand.u32 %s184, 1
        %s546 = smul.addr %s545, 2
        %s547 = scalar_lea.vmem [#allocation10], %s546
        %p548 = pneg %p197
        %p549 = pneg %p194
        %s550 = sand.u32 %s34, 1
        %s551 = scalar_lea.sflag [#allocation12], %s550
        %s552 = sand.u32 %s210, 1
        %s553 = smul.addr %s552, 128
        %s554 = scalar_lea.vmem [#allocation11], %s553
        %p555 = pneg %p223
        %p556 = pneg %p220
        %s557 = sand.u32 %s34, 1
        %s558 = scalar_lea.sflag [#allocation12], %s557
        %s559 = sand.u32 %s236, 1
        %s560 = scalar_lea.vmem [#allocation13], %s559
        %p561 = pneg %p249
        %p562 = pneg %p246
        %p563 = pneg %p275
        %p564 = pneg %p272
        %s565 = sand.u32 %s262, 1
        %s566 = scalar_lea.sflag [#allocation4], %s565
        %s567 = sand.u32 %s262, 1
        %s568 = smul.addr %s567, 16
        %s569 = scalar_lea.vmem [#allocation14], %s568
        %p570 = scmp.lt.s32.totalorder %s39, 1
        %s571 = scalar_select %p570, %s39, 1
        %s572 = scalar_lea.vmem %s3, %s571
        %p574 = scmp.eq.s32.totalorder %s39, 0
        // Predicated region
        $region81: #{encoder.1} parent=51 // pred_check
          %p575 = pneg %p574
        $region82: #{encoder.1} parent=51 // pred_check_branch
          %577 = sbr.rel (%p575) target = $region84
        $region83: #{encoder.1} parent=51 // pred_region
          %v578 = vld [vmem:[%s452] sm:$0xff]
          %v579 = vld [vmem:[%s452 + $0x8] sm:$0xff]
          %580 = vst [vmem:[%s569] sm:$0xff] %v578
          %581 = vst [vmem:[%s569 + $0x8] sm:$0xff] %v579
        $region84: #{encoder.1} parent=51 // pred_fallthru
          _
        %v582 = vld [vmem:[%s569] sm:$0xff]
        %v583 = vld [vmem:[%s569 + $0x8] sm:$0xff]
        %v584 = vpack.c.bf16 %v583, %v582
        %v585 = vld [vmem:[%s461] sm:$0xff]
        %v586 = vld [vmem:[%s461 + $0x8] sm:$0xf]
        %v587 = vld [vmem:[%s461 + $0xc] sm:$0xff]
        %v588 = vld [vmem:[%s461 + $0x14] sm:$0xf]
        %v589 = vld [vmem:[%s461 + $0x18] sm:$0xff]
        %v590 = vld [vmem:[%s461 + $0x20] sm:$0xf]
        %v591 = vld [vmem:[%s461 + $0x24] sm:$0xff]
        %v592 = vld [vmem:[%s461 + $0x2c] sm:$0xf]
        %v593 = vld [vmem:[%s461 + $0x30] sm:$0xff]
        %v594 = vld [vmem:[%s461 + $0x38] sm:$0xf]
        %v595 = vld [vmem:[%s461 + $0x3c] sm:$0xff]
        %v596 = vld [vmem:[%s461 + $0x44] sm:$0xf]
        %v597 = vld [vmem:[%s461 + $0x48] sm:$0xff]
        %v598 = vld [vmem:[%s461 + $0x50] sm:$0xf]
        %v599 = vld [vmem:[%s461 + $0x54] sm:$0xff]
        %v600 = vld [vmem:[%s461 + $0x5c] sm:$0xf]
        %v601 = vld [vmem:[%s461 + $0x60] sm:$0xff]
        %v602 = vld [vmem:[%s461 + $0x68] sm:$0xf]
        %v603 = vld [vmem:[%s461 + $0x6c] sm:$0xff]
        %v604 = vld [vmem:[%s461 + $0x74] sm:$0xf]
        %v605 = vld [vmem:[%s461 + $0x78] sm:$0xff]
        %v606 = vld [vmem:[%s461 + $0x80] sm:$0xf]
        %v607 = vld [vmem:[%s461 + $0x84] sm:$0xff]
        %v608 = vld [vmem:[%s461 + $0x8c] sm:$0xf]
        %v609 = vld [vmem:[%s461 + $0x90] sm:$0xff]
        %v610 = vld [vmem:[%s461 + $0x98] sm:$0xf]
        %v611 = vld [vmem:[%s461 + $0x9c] sm:$0xff]
        %v612 = vld [vmem:[%s461 + $0xa4] sm:$0xf]
        %v613 = vld [vmem:[%s461 + $0xa8] sm:$0xff]
        %v614 = vld [vmem:[%s461 + $0xb0] sm:$0xf]
        %v615 = vld [vmem:[%s461 + $0xb4] sm:$0xff]
        %v616 = vld [vmem:[%s461 + $0xbc] sm:$0xf]
        %v649 = vunpack.c.l.b16 %v585
        %v650 = vunpack.c.h.b16 %v585
        %v651 = vunpack.c.l.b16 %v586
        %v652 = vunpack.c.l.b16 %v587
        %v653 = vunpack.c.h.b16 %v587
        %v654 = vunpack.c.l.b16 %v588
        %v655 = vunpack.c.l.b16 %v589
        %v656 = vunpack.c.h.b16 %v589
        %v657 = vunpack.c.l.b16 %v590
        %v658 = vunpack.c.l.b16 %v591
        %v659 = vunpack.c.h.b16 %v591
        %v660 = vunpack.c.l.b16 %v592
        %v661 = vunpack.c.l.b16 %v593
        %v662 = vunpack.c.h.b16 %v593
        %v663 = vunpack.c.l.b16 %v594
        %v664 = vunpack.c.l.b16 %v595
        %v665 = vunpack.c.h.b16 %v595
        %v666 = vunpack.c.l.b16 %v596
        %v667 = vunpack.c.l.b16 %v597
        %v668 = vunpack.c.h.b16 %v597
        %v669 = vunpack.c.l.b16 %v598
        %v670 = vunpack.c.l.b16 %v599
        %v671 = vunpack.c.h.b16 %v599
        %v672 = vunpack.c.l.b16 %v600
        %v673 = vunpack.c.l.b16 %v601
        %v674 = vunpack.c.h.b16 %v601
        %v675 = vunpack.c.l.b16 %v602
        %v676 = vunpack.c.l.b16 %v603
        %v677 = vunpack.c.h.b16 %v603
        %v678 = vunpack.c.l.b16 %v604
        %v679 = vunpack.c.l.b16 %v605
        %v680 = vunpack.c.h.b16 %v605
        %v681 = vunpack.c.l.b16 %v606
        %v682 = vunpack.c.l.b16 %v607
        %v683 = vunpack.c.h.b16 %v607
        %v684 = vunpack.c.l.b16 %v608
        %v685 = vunpack.c.l.b16 %v609
        %v686 = vunpack.c.h.b16 %v609
        %v687 = vunpack.c.l.b16 %v610
        %v688 = vunpack.c.l.b16 %v611
        %v689 = vunpack.c.h.b16 %v611
        %v690 = vunpack.c.l.b16 %v612
        %v691 = vunpack.c.l.b16 %v613
        %v692 = vunpack.c.h.b16 %v613
        %v693 = vunpack.c.l.b16 %v614
        %v694 = vunpack.c.l.b16 %v615
        %v695 = vunpack.c.h.b16 %v615
        %v696 = vunpack.c.l.b16 %v616
        %v697 = vpack.c.b16 %v652, %v649
        %v698 = vpack.c.b16 %v653, %v650
        %v699 = vpack.c.b16 %v654, %v651
        %v700 = vpack.c.b16 %v658, %v655
        %v701 = vpack.c.b16 %v659, %v656
        %v702 = vpack.c.b16 %v660, %v657
        %v703 = vpack.c.b16 %v664, %v661
        %v704 = vpack.c.b16 %v665, %v662
        %v705 = vpack.c.b16 %v666, %v663
        %v706 = vpack.c.b16 %v670, %v667
        %v707 = vpack.c.b16 %v671, %v668
        %v708 = vpack.c.b16 %v672, %v669
        %v709 = vpack.c.b16 %v676, %v673
        %v710 = vpack.c.b16 %v677, %v674
        %v711 = vpack.c.b16 %v678, %v675
        %v712 = vpack.c.b16 %v682, %v679
        %v713 = vpack.c.b16 %v683, %v680
        %v714 = vpack.c.b16 %v684, %v681
        %v715 = vpack.c.b16 %v688, %v685
        %v716 = vpack.c.b16 %v689, %v686
        %v717 = vpack.c.b16 %v690, %v687
        %v718 = vpack.c.b16 %v694, %v691
        %v719 = vpack.c.b16 %v695, %v692
        %v720 = vpack.c.b16 %v696, %v693
        %745 = vmatprep.subr.bf16.mxu0 %v719
        %746 = vmatpush1.bf16.msra.mxu0 %v718
        %747 = vmatprep.subr.bf16.mxu0 %v716
        %748 = vmatpush1.bf16.msra.mxu0 %v715
        %749 = vmatprep.subr.bf16.mxu0 %v713
        %750 = vmatpush1.bf16.msra.mxu0 %v712
        %751 = vmatprep.subr.bf16.mxu0 %v710
        %752 = vmatpush1.bf16.msra.mxu0 %v709
        %753 = vmatprep.subr.bf16.mxu0 %v707
        %754 = vmatpush1.bf16.msra.mxu0 %v706
        %755 = vmatprep.subr.bf16.mxu0 %v704
        %756 = vmatpush1.bf16.msra.mxu0 %v703
        %757 = vmatprep.subr.bf16.mxu0 %v701
        %758 = vmatpush1.bf16.msra.mxu0 %v700
        %759 = vmatprep.subr.bf16.mxu0 %v698
        %760 = vmatpush1.bf16.msra.mxu0 %v697
        %761 = vmatprep.subr.bf16.mxu0 0
        %762 = vmatpush2.bf16.msra.mxu0 0
        %763 = vmatprep.subr.bf16.mxu0 0
        %764 = vmatpush2.bf16.msra.mxu0 0
        %765 = vmatprep.subr.bf16.mxu0 0
        %766 = vmatpush2.bf16.msra.mxu0 0
        %767 = vmatprep.subr.bf16.mxu0 0
        %768 = vmatpush2.bf16.msra.mxu0 0
        %769 = vmatprep.subr.bf16.mxu0 0
        %770 = vmatpush2.bf16.msra.mxu0 0
        %771 = vmatprep.subr.bf16.mxu0 0
        %772 = vmatpush2.bf16.msra.mxu0 0
        %773 = vmatprep.subr.bf16.mxu0 0
        %774 = vmatpush2.bf16.msra.mxu0 0
        %775 = vmatprep.subr.bf16.mxu0 0
        %776 = vmatpush2.bf16.msra.mxu0 0
        %777 = vmatprep.mubr.bf16.mxu0 0
        %778 = vmatmul.mubr.bf16.gmra.mxu0 %v584
        %v779 = vpop.f32.mrf.mxu0
        %v780 = vadd.f32 0.0, %v779
        %v781 = vpop.f32.mrf.mxu0
        %v782 = vadd.f32 0.0, %v781
        %v783 = vpop.f32.mrf.mxu0
        %v784 = vadd.f32 0.0, %v783
        %v785 = vpop.f32.mrf.mxu0
        %v786 = vadd.f32 0.0, %v785
        %787 = vdwg.mxu0
        %788 = vmatprep.subr.bf16.mxu0 0
        %789 = vmatpush1.bf16.msra.mxu0 %v720
        %790 = vmatprep.subr.bf16.mxu0 0
        %791 = vmatpush1.bf16.msra.mxu0 %v717
        %792 = vmatprep.subr.bf16.mxu0 0
        %793 = vmatpush1.bf16.msra.mxu0 %v714
        %794 = vmatprep.subr.bf16.mxu0 0
        %795 = vmatpush1.bf16.msra.mxu0 %v711
        %796 = vmatprep.subr.bf16.mxu0 0
        %797 = vmatpush1.bf16.msra.mxu0 %v708
        %798 = vmatprep.subr.bf16.mxu0 0
        %799 = vmatpush1.bf16.msra.mxu0 %v705
        %800 = vmatprep.subr.bf16.mxu0 0
        %801 = vmatpush1.bf16.msra.mxu0 %v702
        %802 = vmatprep.subr.bf16.mxu0 0
        %803 = vmatpush1.bf16.msra.mxu0 %v699
        %804 = vmatprep.subr.bf16.mxu0 0
        %805 = vmatpush2.bf16.msra.mxu0 0
        %806 = vmatprep.subr.bf16.mxu0 0
        %807 = vmatpush2.bf16.msra.mxu0 0
        %808 = vmatprep.subr.bf16.mxu0 0
        %809 = vmatpush2.bf16.msra.mxu0 0
        %810 = vmatprep.subr.bf16.mxu0 0
        %811 = vmatpush2.bf16.msra.mxu0 0
        %812 = vmatprep.subr.bf16.mxu0 0
        %813 = vmatpush2.bf16.msra.mxu0 0
        %814 = vmatprep.subr.bf16.mxu0 0
        %815 = vmatpush2.bf16.msra.mxu0 0
        %816 = vmatprep.subr.bf16.mxu0 0
        %817 = vmatpush2.bf16.msra.mxu0 0
        %818 = vmatprep.subr.bf16.mxu0 0
        %819 = vmatpush2.bf16.msra.mxu0 0
        %820 = vmatprep.mubr.bf16.mxu0 0
        %821 = vmatmul.mubr.bf16.gmra.mxu0 %v584
        %v822 = vpop.f32.mrf.mxu0
        %v823 = vadd.f32 0.0, %v822
        %v824 = vpop.f32.mrf.mxu0
        %v825 = vpop.f32.mrf.mxu0
        %v826 = vadd.f32 0.0, %v825
        %v827 = vpop.f32.mrf.mxu0
        %828 = vdwg.mxu0
        %v829 = vpack.c.bf16 %v784, %v780
        %v830 = vpack.c.bf16 %v786, %v782
        %v831 = vpack.c.bf16 %v826, %v823
        %vm832 = vcmask 523264
        %v834 = vsel %vm832, %v829, 0
        %v837 = vsel %vm832, %v830, 0
        %839 = vmatprep.subr.bf16.mxu0 0
        %840 = vmatpush1.bf16.xpose.msra.mxu0 0
        %841 = vmatprep.subr.bf16.mxu0 0
        %842 = vmatpush1.bf16.xpose.msra.mxu0 0
        %843 = vmatprep.subr.bf16.mxu0 0
        %844 = vmatpush1.bf16.xpose.msra.mxu0 0
        %845 = vmatprep.subr.bf16.mxu0 0
        %846 = vmatpush1.bf16.xpose.msra.mxu0 0
        %847 = vmatprep.subr.bf16.mxu0 0
        %848 = vmatpush1.bf16.xpose.msra.mxu0 0
        %849 = vmatprep.subr.bf16.mxu0 0
        %850 = vmatpush1.bf16.xpose.msra.mxu0 0
        %851 = vmatprep.subr.bf16.mxu0 0
        %852 = vmatpush1.bf16.xpose.msra.mxu0 0
        %853 = vmatprep.subr.bf16.mxu0 0
        %854 = vmatpush1.bf16.xpose.msra.mxu0 %v837
        %855 = vmatprep.subr.bf16.mxu0 0
        %856 = vmatpush2.bf16.xpose.msra.mxu0 0
        %857 = vmatprep.subr.bf16.mxu0 0
        %858 = vmatpush2.bf16.xpose.msra.mxu0 0
        %859 = vmatprep.subr.bf16.mxu0 0
        %860 = vmatpush2.bf16.xpose.msra.mxu0 0
        %861 = vmatprep.subr.bf16.mxu0 0
        %862 = vmatpush2.bf16.xpose.msra.mxu0 0
        %863 = vmatprep.subr.bf16.mxu0 0
        %864 = vmatpush2.bf16.xpose.msra.mxu0 0
        %865 = vmatprep.subr.bf16.mxu0 0
        %866 = vmatpush2.bf16.xpose.msra.mxu0 0
        %867 = vmatprep.subr.bf16.mxu0 0
        %868 = vmatpush2.bf16.xpose.msra.mxu0 0
        %869 = vmatprep.subr.bf16.mxu0 0
        %870 = vmatpush2.bf16.xpose.msra.mxu0 0
        %871 = vmatprep.mubr.bf16.mxu0 0
        %872 = vmatmul.mubr.bf16.gmra.mxu0 %v834
        %v873 = vpop.f32.mrf.mxu0
        %v874 = vadd.f32 0.0, %v873
        %v875 = vpop.f32.mrf.mxu0
        %v876 = vpop.f32.mrf.mxu0
        %v877 = vadd.f32 0.0, %v876
        %v878 = vpop.f32.mrf.mxu0
        %879 = vdwg.mxu0
        %vm880 = vcmask 130048
        %v881 = vsel %vm880, %v874, -inf
        %882 = vmax.xlane.f32.xlu0 %v881
        %v883 = vpop.xlane.xlu0 %882
        %v884 = vsel %vm880, %v877, -inf
        %885 = vmax.xlane.f32.xlu0 %v884
        %v886 = vpop.xlane.xlu0 %885
        %v887 = vsub.f32 %v874, %v883
        %v888 = vsub.f32 %v877, %v886
        %v889 = vmul.f32 %v887, 1.442695
        %v890 = vpow.pop %v889
        %v891 = vmul.f32 %v888, 1.442695
        %v892 = vpow.pop %v891
        %v893 = vsel %vm880, %v890, 0.0
        %894 = vadd.xlane.f32.xlu0 %v893
        %v895 = vpop.xlane.xlu0 %894
        %v896 = vsel %vm880, %v892, 0.0
        %897 = vadd.xlane.f32.xlu0 %v896
        %v898 = vpop.xlane.xlu0 %897
        %v899 = vrcp.pop %v895
        %v900 = vrcp.pop %v898
        %v901 = vmul.f32 %v890, %v899
        %v902 = vmul.f32 %v892, %v900
        %v903 = vpack.c.bf16 %v902, %v901
        %v905 = vsel %vm880, %v903, 0
        %907 = vmatprep.subr.bf16.mxu0 0
        %908 = vmatpush1.bf16.msra.mxu0 0
        %909 = vmatprep.subr.bf16.mxu0 0
        %910 = vmatpush1.bf16.msra.mxu0 0
        %911 = vmatprep.subr.bf16.mxu0 0
        %912 = vmatpush1.bf16.msra.mxu0 0
        %913 = vmatprep.subr.bf16.mxu0 0
        %914 = vmatpush1.bf16.msra.mxu0 0
        %915 = vmatprep.subr.bf16.mxu0 0
        %916 = vmatpush1.bf16.msra.mxu0 0
        %917 = vmatprep.subr.bf16.mxu0 0
        %918 = vmatpush1.bf16.msra.mxu0 0
        %919 = vmatprep.subr.bf16.mxu0 0
        %920 = vmatpush1.bf16.msra.mxu0 0
        %921 = vmatprep.subr.bf16.mxu0 0
        %922 = vmatpush1.bf16.msra.mxu0 %v831
        %923 = vmatprep.subr.bf16.mxu0 0
        %924 = vmatpush2.bf16.msra.mxu0 0
        %925 = vmatprep.subr.bf16.mxu0 0
        %926 = vmatpush2.bf16.msra.mxu0 0
        %927 = vmatprep.subr.bf16.mxu0 0
        %928 = vmatpush2.bf16.msra.mxu0 0
        %929 = vmatprep.subr.bf16.mxu0 0
        %930 = vmatpush2.bf16.msra.mxu0 0
        %931 = vmatprep.subr.bf16.mxu0 0
        %932 = vmatpush2.bf16.msra.mxu0 0
        %933 = vmatprep.subr.bf16.mxu0 0
        %934 = vmatpush2.bf16.msra.mxu0 0
        %935 = vmatprep.subr.bf16.mxu0 0
        %936 = vmatpush2.bf16.msra.mxu0 0
        %937 = vmatprep.subr.bf16.mxu0 0
        %938 = vmatpush2.bf16.msra.mxu0 0
        %939 = vmatprep.mubr.bf16.mxu0 0
        %940 = vmatmul.mubr.bf16.gmra.mxu0 %v905
        %v941 = vpop.f32.mrf.mxu0
        %v942 = vadd.f32 0.0, %v941
        %v943 = vpop.f32.mrf.mxu0
        %v944 = vpop.f32.mrf.mxu0
        %v945 = vadd.f32 0.0, %v944
        %v946 = vpop.f32.mrf.mxu0
        %947 = vdwg.mxu0
        %v948 = vpack.c.bf16 %v945, %v942
        %v949 = vld [vmem:[%s470] sm:$0xf]
        %v950 = vld [vmem:[%s470 + $0x4] sm:$0xf]
        %v951 = vld [vmem:[%s470 + $0x8] sm:$0xf]
        %v952 = vld [vmem:[%s470 + $0xc] sm:$0xf]
        %v953 = vld [vmem:[%s470 + $0x10] sm:$0xf]
        %v954 = vld [vmem:[%s470 + $0x14] sm:$0xf]
        %v955 = vld [vmem:[%s470 + $0x18] sm:$0xf]
        %v956 = vld [vmem:[%s470 + $0x1c] sm:$0xf]
        %958 = vrot.lane.b32.xlu0 %v829, 64
        %v959 = vpop.permute.xlu0 %958
        %961 = vrot.lane.b32.xlu0 %v830, 64
        %v962 = vpop.permute.xlu0 %961
        %v964 = vsel %vm832, %v959, 0
        %v967 = vsel %vm832, %v962, 0
        %969 = vmatprep.subr.bf16.mxu0 0
        %970 = vmatpush1.bf16.xpose.msra.mxu0 0
        %971 = vmatprep.subr.bf16.mxu0 0
        %972 = vmatpush1.bf16.xpose.msra.mxu0 0
        %973 = vmatprep.subr.bf16.mxu0 0
        %974 = vmatpush1.bf16.xpose.msra.mxu0 0
        %975 = vmatprep.subr.bf16.mxu0 0
        %976 = vmatpush1.bf16.xpose.msra.mxu0 0
        %977 = vmatprep.subr.bf16.mxu0 0
        %978 = vmatpush1.bf16.xpose.msra.mxu0 0
        %979 = vmatprep.subr.bf16.mxu0 0
        %980 = vmatpush1.bf16.xpose.msra.mxu0 0
        %981 = vmatprep.subr.bf16.mxu0 0
        %982 = vmatpush1.bf16.xpose.msra.mxu0 0
        %983 = vmatprep.subr.bf16.mxu0 0
        %984 = vmatpush1.bf16.xpose.msra.mxu0 %v967
        %985 = vmatprep.subr.bf16.mxu0 0
        %986 = vmatpush2.bf16.xpose.msra.mxu0 0
        %987 = vmatprep.subr.bf16.mxu0 0
        %988 = vmatpush2.bf16.xpose.msra.mxu0 0
        %989 = vmatprep.subr.bf16.mxu0 0
        %990 = vmatpush2.bf16.xpose.msra.mxu0 0
        %991 = vmatprep.subr.bf16.mxu0 0
        %992 = vmatpush2.bf16.xpose.msra.mxu0 0
        %993 = vmatprep.subr.bf16.mxu0 0
        %994 = vmatpush2.bf16.xpose.msra.mxu0 0
        %995 = vmatprep.subr.bf16.mxu0 0
        %996 = vmatpush2.bf16.xpose.msra.mxu0 0
        %997 = vmatprep.subr.bf16.mxu0 0
        %998 = vmatpush2.bf16.xpose.msra.mxu0 0
        %999 = vmatprep.subr.bf16.mxu0 0
        %1000 = vmatpush2.bf16.xpose.msra.mxu0 0
        %1001 = vmatprep.mubr.bf16.mxu0 0
        %1002 = vmatmul.mubr.bf16.gmra.mxu0 %v964
        %v1003 = vpop.f32.mrf.mxu0
        %v1004 = vadd.f32 0.0, %v1003
        %v1005 = vpop.f32.mrf.mxu0
        %v1006 = vpop.f32.mrf.mxu0
        %v1007 = vadd.f32 0.0, %v1006
        %v1008 = vpop.f32.mrf.mxu0
        %1009 = vdwg.mxu0
        %v1010 = vsel %vm880, %v1004, -inf
        %1011 = vmax.xlane.f32.xlu0 %v1010
        %v1012 = vpop.xlane.xlu0 %1011
        %v1013 = vsel %vm880, %v1007, -inf
        %1014 = vmax.xlane.f32.xlu0 %v1013
        %v1015 = vpop.xlane.xlu0 %1014
        %v1016 = vsub.f32 %v1004, %v1012
        %v1017 = vsub.f32 %v1007, %v1015
        %v1018 = vmul.f32 %v1016, 1.442695
        %v1019 = vpow.pop %v1018
        %v1020 = vmul.f32 %v1017, 1.442695
        %v1021 = vpow.pop %v1020
        %v1022 = vsel %vm880, %v1019, 0.0
        %1023 = vadd.xlane.f32.xlu0 %v1022
        %v1024 = vpop.xlane.xlu0 %1023
        %v1025 = vsel %vm880, %v1021, 0.0
        %1026 = vadd.xlane.f32.xlu0 %v1025
        %v1027 = vpop.xlane.xlu0 %1026
        %v1028 = vrcp.pop %v1024
        %v1029 = vrcp.pop %v1027
        %v1030 = vmul.f32 %v1019, %v1028
        %v1031 = vmul.f32 %v1021, %v1029
        %v1032 = vpack.c.bf16 %v1031, %v1030
        %1034 = vrot.lane.b32.xlu0 %v831, 64
        %v1035 = vpop.permute.xlu0 %1034
        %v1038 = vsel %vm880, %v1032, 0
        %1040 = vmatprep.subr.bf16.mxu0 0
        %1041 = vmatpush1.bf16.msra.mxu0 0
        %1042 = vmatprep.subr.bf16.mxu0 0
        %1043 = vmatpush1.bf16.msra.mxu0 0
        %1044 = vmatprep.subr.bf16.mxu0 0
        %1045 = vmatpush1.bf16.msra.mxu0 0
        %1046 = vmatprep.subr.bf16.mxu0 0
        %1047 = vmatpush1.bf16.msra.mxu0 0
        %1048 = vmatprep.subr.bf16.mxu0 0
        %1049 = vmatpush1.bf16.msra.mxu0 0
        %1050 = vmatprep.subr.bf16.mxu0 0
        %1051 = vmatpush1.bf16.msra.mxu0 0
        %1052 = vmatprep.subr.bf16.mxu0 0
        %1053 = vmatpush1.bf16.msra.mxu0 0
        %1054 = vmatprep.subr.bf16.mxu0 0
        %1055 = vmatpush1.bf16.msra.mxu0 %v1035
        %1056 = vmatprep.subr.bf16.mxu0 0
        %1057 = vmatpush2.bf16.msra.mxu0 0
        %1058 = vmatprep.subr.bf16.mxu0 0
        %1059 = vmatpush2.bf16.msra.mxu0 0
        %1060 = vmatprep.subr.bf16.mxu0 0
        %1061 = vmatpush2.bf16.msra.mxu0 0
        %1062 = vmatprep.subr.bf16.mxu0 0
        %1063 = vmatpush2.bf16.msra.mxu0 0
        %1064 = vmatprep.subr.bf16.mxu0 0
        %1065 = vmatpush2.bf16.msra.mxu0 0
        %1066 = vmatprep.subr.bf16.mxu0 0
        %1067 = vmatpush2.bf16.msra.mxu0 0
        %1068 = vmatprep.subr.bf16.mxu0 0
        %1069 = vmatpush2.bf16.msra.mxu0 0
        %1070 = vmatprep.subr.bf16.mxu0 0
        %1071 = vmatpush2.bf16.msra.mxu0 0
        %1072 = vmatprep.mubr.bf16.mxu0 0
        %1073 = vmatmul.mubr.bf16.gmra.mxu0 %v1038
        %v1074 = vpop.f32.mrf.mxu0
        %v1075 = vadd.f32 0.0, %v1074
        %v1076 = vpop.f32.mrf.mxu0
        %v1077 = vpop.f32.mrf.mxu0
        %v1078 = vadd.f32 0.0, %v1077
        %v1079 = vpop.f32.mrf.mxu0
        %1080 = vdwg.mxu0
        %v1081 = vpack.c.bf16 %v1078, %v1075
        %v1082 = vld [vmem:[%s470 + $0x20] sm:$0xf]
        %v1083 = vld [vmem:[%s470 + $0x24] sm:$0xf]
        %v1084 = vld [vmem:[%s470 + $0x28] sm:$0xf]
        %v1085 = vld [vmem:[%s470 + $0x2c] sm:$0xf]
        %v1086 = vld [vmem:[%s470 + $0x30] sm:$0xf]
        %v1087 = vld [vmem:[%s470 + $0x34] sm:$0xf]
        %v1088 = vld [vmem:[%s470 + $0x38] sm:$0xf]
        %v1089 = vld [vmem:[%s470 + $0x3c] sm:$0xf]
        %v1098 = vunpack.c.l.b16 %v1082
        %v1099 = vunpack.c.l.b16 %v1083
        %v1100 = vunpack.c.l.b16 %v1084
        %v1101 = vunpack.c.l.b16 %v1085
        %v1102 = vunpack.c.l.b16 %v1086
        %v1103 = vunpack.c.l.b16 %v1087
        %v1104 = vunpack.c.l.b16 %v1088
        %v1105 = vunpack.c.l.b16 %v1089
        %v1106 = vpack.c.b16 %v1099, %v1098
        %v1107 = vpack.c.b16 %v1101, %v1100
        %v1108 = vpack.c.b16 %v1103, %v1102
        %v1109 = vpack.c.b16 %v1105, %v1104
        %v1115 = vsel %vm832, %v1081, 0
        %1117 = vmatprep.subr.bf16.mxu0 0
        %1118 = vmatpush1.bf16.msra.mxu0 0
        %1119 = vmatprep.subr.bf16.mxu0 0
        %1120 = vmatpush1.bf16.msra.mxu0 0
        %1121 = vmatprep.subr.bf16.mxu0 0
        %1122 = vmatpush1.bf16.msra.mxu0 0
        %1123 = vmatprep.subr.bf16.mxu0 0
        %1124 = vmatpush1.bf16.msra.mxu0 0
        %1125 = vmatprep.subr.bf16.mxu0 0
        %1126 = vmatpush1.bf16.msra.mxu0 %v1109
        %1127 = vmatprep.subr.bf16.mxu0 0
        %1128 = vmatpush1.bf16.msra.mxu0 %v1108
        %1129 = vmatprep.subr.bf16.mxu0 0
        %1130 = vmatpush1.bf16.msra.mxu0 %v1107
        %1131 = vmatprep.subr.bf16.mxu0 0
        %1132 = vmatpush1.bf16.msra.mxu0 %v1106
        %1133 = vmatprep.subr.bf16.mxu0 0
        %1134 = vmatpush2.bf16.msra.mxu0 0
        %1135 = vmatprep.subr.bf16.mxu0 0
        %1136 = vmatpush2.bf16.msra.mxu0 0
        %1137 = vmatprep.subr.bf16.mxu0 0
        %1138 = vmatpush2.bf16.msra.mxu0 0
        %1139 = vmatprep.subr.bf16.mxu0 0
        %1140 = vmatpush2.bf16.msra.mxu0 0
        %1141 = vmatprep.subr.bf16.mxu0 0
        %1142 = vmatpush2.bf16.msra.mxu0 0
        %1143 = vmatprep.subr.bf16.mxu0 0
        %1144 = vmatpush2.bf16.msra.mxu0 0
        %1145 = vmatprep.subr.bf16.mxu0 0
        %1146 = vmatpush2.bf16.msra.mxu0 0
        %1147 = vmatprep.subr.bf16.mxu0 0
        %1148 = vmatpush2.bf16.msra.mxu0 0
        %1149 = vmatprep.mubr.bf16.mxu0 0
        %1150 = vmatmul.mubr.bf16.gmra.mxu0 %v1115
        %v1151 = vpop.f32.mrf.mxu0
        %v1152 = vadd.f32 0.0, %v1151
        %v1153 = vpop.f32.mrf.mxu0
        %v1154 = vpop.f32.mrf.mxu0
        %v1155 = vadd.f32 0.0, %v1154
        %v1156 = vpop.f32.mrf.mxu0
        %1157 = vdwg.mxu0
        %v1166 = vunpack.c.l.b16 %v949
        %v1167 = vunpack.c.l.b16 %v950
        %v1168 = vunpack.c.l.b16 %v951
        %v1169 = vunpack.c.l.b16 %v952
        %v1170 = vunpack.c.l.b16 %v953
        %v1171 = vunpack.c.l.b16 %v954
        %v1172 = vunpack.c.l.b16 %v955
        %v1173 = vunpack.c.l.b16 %v956
        %v1174 = vpack.c.b16 %v1167, %v1166
        %v1175 = vpack.c.b16 %v1169, %v1168
        %v1176 = vpack.c.b16 %v1171, %v1170
        %v1177 = vpack.c.b16 %v1173, %v1172
        %v1183 = vsel %vm832, %v948, 0
        %1185 = vmatprep.subr.bf16.mxu0 0
        %1186 = vmatpush1.bf16.msra.mxu0 0
        %1187 = vmatprep.subr.bf16.mxu0 0
        %1188 = vmatpush1.bf16.msra.mxu0 0
        %1189 = vmatprep.subr.bf16.mxu0 0
        %1190 = vmatpush1.bf16.msra.mxu0 0
        %1191 = vmatprep.subr.bf16.mxu0 0
        %1192 = vmatpush1.bf16.msra.mxu0 0
        %1193 = vmatprep.subr.bf16.mxu0 0
        %1194 = vmatpush1.bf16.msra.mxu0 %v1177
        %1195 = vmatprep.subr.bf16.mxu0 0
        %1196 = vmatpush1.bf16.msra.mxu0 %v1176
        %1197 = vmatprep.subr.bf16.mxu0 0
        %1198 = vmatpush1.bf16.msra.mxu0 %v1175
        %1199 = vmatprep.subr.bf16.mxu0 0
        %1200 = vmatpush1.bf16.msra.mxu0 %v1174
        %1201 = vmatprep.subr.bf16.mxu0 0
        %1202 = vmatpush2.bf16.msra.mxu0 0
        %1203 = vmatprep.subr.bf16.mxu0 0
        %1204 = vmatpush2.bf16.msra.mxu0 0
        %1205 = vmatprep.subr.bf16.mxu0 0
        %1206 = vmatpush2.bf16.msra.mxu0 0
        %1207 = vmatprep.subr.bf16.mxu0 0
        %1208 = vmatpush2.bf16.msra.mxu0 0
        %1209 = vmatprep.subr.bf16.mxu0 0
        %1210 = vmatpush2.bf16.msra.mxu0 0
        %1211 = vmatprep.subr.bf16.mxu0 0
        %1212 = vmatpush2.bf16.msra.mxu0 0
        %1213 = vmatprep.subr.bf16.mxu0 0
        %1214 = vmatpush2.bf16.msra.mxu0 0
        %1215 = vmatprep.subr.bf16.mxu0 0
        %1216 = vmatpush2.bf16.msra.mxu0 0
        %1217 = vmatprep.mubr.bf16.mxu0 0
        %1218 = vmatmul.mubr.bf16.gmra.mxu0 %v1183
        %v1219 = vpop.f32.mrf.mxu0
        %v1220 = vadd.f32 %v1152, %v1219
        %v1221 = vpop.f32.mrf.mxu0
        %v1222 = vpop.f32.mrf.mxu0
        %v1223 = vadd.f32 %v1155, %v1222
        %v1224 = vpop.f32.mrf.mxu0
        %1225 = vdwg.mxu0
        %v1226 = vld [vmem:[%s572] sm:$0x1]
        %v1228 = vlaneseq
        %v1229 = vshrl.u32 %v1228, 7
        %v1230 = vsub.s32 0, %v1229
        %v1231 = vrot.slane %v1226, %v1230
        %v1233 = vadd.f32 %v1220, %v1231
        %v1234 = vadd.f32 %v1223, %v1231
        %v1235 = vadd.f32 %v1233, %v582
        %v1236 = vadd.f32 %v1234, %v583
        %v1237 = vmul.f32 %v1235, %v1235
        %v1238 = vmul.f32 %v1236, %v1236
        %1239 = vadd.xlane.f32.xlu0 %v1237
        %v1240 = vpop.xlane.xlu0 %1239
        %1241 = vadd.xlane.f32.xlu0 %v1238
        %v1242 = vpop.xlane.xlu0 %1241
        %v1243 = vmax.f32 %v1240, 1e-24
        %v1244 = vmax.f32 %v1242, 1e-24
        %v1245 = vrsqrt.pop %v1243
        %v1246 = vrsqrt.pop %v1244
        %v1247 = vmul.f32 %v1235, %v1245
        %v1248 = vmul.f32 %v1236, %v1246
        %v1249 = vpack.c.bf16 %v1248, %v1247
        %v1250 = vld [vmem:[%s479] sm:$0xff]
        %v1251 = vld [vmem:[%s479 + $0x8] sm:$0xff]
        %v1252 = vld [vmem:[%s479 + $0x10] sm:$0xff]
        %v1253 = vld [vmem:[%s479 + $0x18] sm:$0xff]
        %v1254 = vld [vmem:[%s479 + $0x20] sm:$0xff]
        %v1255 = vld [vmem:[%s479 + $0x28] sm:$0xff]
        %v1256 = vld [vmem:[%s479 + $0x30] sm:$0xff]
        %v1257 = vld [vmem:[%s479 + $0x38] sm:$0xff]
        %v1258 = vld [vmem:[%s479 + $0x40] sm:$0xff]
        %v1259 = vld [vmem:[%s479 + $0x48] sm:$0xff]
        %v1260 = vld [vmem:[%s479 + $0x50] sm:$0xff]
        %v1261 = vld [vmem:[%s479 + $0x58] sm:$0xff]
        %v1262 = vld [vmem:[%s479 + $0x60] sm:$0xff]
        %v1263 = vld [vmem:[%s479 + $0x68] sm:$0xff]
        %v1264 = vld [vmem:[%s479 + $0x70] sm:$0xff]
        %v1265 = vld [vmem:[%s479 + $0x78] sm:$0xff]
        %v1266 = vld [vmem:[%s488] sm:$0x3]
        %v1268 = vlaneseq
        %v1269 = vshrl.u32 %v1268, 7
        %v1270 = vsub.s32 0, %v1269
        %v1271 = vrot.slane %v1266, %v1270
        %v1272 = vlaneseq
        %v1273 = vshrl.u32 %v1272, 7
        %v1274 = vsub.s32 1, %v1273
        %v1275 = vrot.slane %v1266, %v1274
        %v1294 = vunpack.c.l.b16 %v1250
        %v1295 = vunpack.c.h.b16 %v1250
        %v1296 = vunpack.c.l.b16 %v1251
        %v1297 = vunpack.c.h.b16 %v1251
        %v1298 = vunpack.c.l.b16 %v1252
        %v1299 = vunpack.c.h.b16 %v1252
        %v1300 = vunpack.c.l.b16 %v1253
        %v1301 = vunpack.c.h.b16 %v1253
        %v1302 = vunpack.c.l.b16 %v1254
        %v1303 = vunpack.c.h.b16 %v1254
        %v1304 = vunpack.c.l.b16 %v1255
        %v1305 = vunpack.c.h.b16 %v1255
        %v1306 = vunpack.c.l.b16 %v1256
        %v1307 = vunpack.c.h.b16 %v1256
        %v1308 = vunpack.c.l.b16 %v1257
        %v1309 = vunpack.c.h.b16 %v1257
        %v1310 = vunpack.c.l.b16 %v1258
        %v1311 = vunpack.c.h.b16 %v1258
        %v1312 = vunpack.c.l.b16 %v1259
        %v1313 = vunpack.c.h.b16 %v1259
        %v1314 = vunpack.c.l.b16 %v1260
        %v1315 = vunpack.c.h.b16 %v1260
        %v1316 = vunpack.c.l.b16 %v1261
        %v1317 = vunpack.c.h.b16 %v1261
        %v1318 = vunpack.c.l.b16 %v1262
        %v1319 = vunpack.c.h.b16 %v1262
        %v1320 = vunpack.c.l.b16 %v1263
        %v1321 = vunpack.c.h.b16 %v1263
        %v1322 = vunpack.c.l.b16 %v1264
        %v1323 = vunpack.c.h.b16 %v1264
        %v1324 = vunpack.c.l.b16 %v1265
        %v1325 = vunpack.c.h.b16 %v1265
        %v1326 = vpack.c.b16 %v1296, %v1294
        %v1327 = vpack.c.b16 %v1297, %v1295
        %v1328 = vpack.c.b16 %v1300, %v1298
        %v1329 = vpack.c.b16 %v1301, %v1299
        %v1330 = vpack.c.b16 %v1304, %v1302
        %v1331 = vpack.c.b16 %v1305, %v1303
        %v1332 = vpack.c.b16 %v1308, %v1306
        %v1333 = vpack.c.b16 %v1309, %v1307
        %v1334 = vpack.c.b16 %v1312, %v1310
        %v1335 = vpack.c.b16 %v1313, %v1311
        %v1336 = vpack.c.b16 %v1316, %v1314
        %v1337 = vpack.c.b16 %v1317, %v1315
        %v1338 = vpack.c.b16 %v1320, %v1318
        %v1339 = vpack.c.b16 %v1321, %v1319
        %v1340 = vpack.c.b16 %v1324, %v1322
        %v1341 = vpack.c.b16 %v1325, %v1323
        %1358 = vmatprep.subr.bf16.mxu0 %v1341
        %1359 = vmatpush1.bf16.msra.mxu0 %v1340
        %1360 = vmatprep.subr.bf16.mxu0 %v1339
        %1361 = vmatpush1.bf16.msra.mxu0 %v1338
        %1362 = vmatprep.subr.bf16.mxu0 %v1337
        %1363 = vmatpush1.bf16.msra.mxu0 %v1336
        %1364 = vmatprep.subr.bf16.mxu0 %v1335
        %1365 = vmatpush1.bf16.msra.mxu0 %v1334
        %1366 = vmatprep.subr.bf16.mxu0 %v1333
        %1367 = vmatpush1.bf16.msra.mxu0 %v1332
        %1368 = vmatprep.subr.bf16.mxu0 %v1331
        %1369 = vmatpush1.bf16.msra.mxu0 %v1330
        %1370 = vmatprep.subr.bf16.mxu0 %v1329
        %1371 = vmatpush1.bf16.msra.mxu0 %v1328
        %1372 = vmatprep.subr.bf16.mxu0 %v1327
        %1373 = vmatpush1.bf16.msra.mxu0 %v1326
        %1374 = vmatprep.subr.bf16.mxu0 0
        %1375 = vmatpush2.bf16.msra.mxu0 0
        %1376 = vmatprep.subr.bf16.mxu0 0
        %1377 = vmatpush2.bf16.msra.mxu0 0
        %1378 = vmatprep.subr.bf16.mxu0 0
        %1379 = vmatpush2.bf16.msra.mxu0 0
        %1380 = vmatprep.subr.bf16.mxu0 0
        %1381 = vmatpush2.bf16.msra.mxu0 0
        %1382 = vmatprep.subr.bf16.mxu0 0
        %1383 = vmatpush2.bf16.msra.mxu0 0
        %1384 = vmatprep.subr.bf16.mxu0 0
        %1385 = vmatpush2.bf16.msra.mxu0 0
        %1386 = vmatprep.subr.bf16.mxu0 0
        %1387 = vmatpush2.bf16.msra.mxu0 0
        %1388 = vmatprep.subr.bf16.mxu0 0
        %1389 = vmatpush2.bf16.msra.mxu0 0
        %1390 = vmatprep.mubr.bf16.mxu0 0
        %1391 = vmatmul.mubr.bf16.gmra.mxu0 %v1249
        %v1392 = vpop.f32.mrf.mxu0
        %v1393 = vadd.f32 %v1271, %v1392
        %v1394 = vpop.f32.mrf.mxu0
        %v1395 = vadd.f32 %v1275, %v1394
        %v1396 = vpop.f32.mrf.mxu0
        %v1397 = vadd.f32 %v1271, %v1396
        %v1398 = vpop.f32.mrf.mxu0
        %v1399 = vadd.f32 %v1275, %v1398
        %1400 = vdwg.mxu0
        %v1401 = vmax.f32 %v1393, 0.0
        %v1402 = vmax.f32 %v1395, 0.0
        %v1403 = vmax.f32 %v1397, 0.0
        %v1404 = vmax.f32 %v1399, 0.0
        %v1405 = vpack.c.bf16 %v1403, %v1401
        %v1406 = vpack.c.bf16 %v1404, %v1402
        %v1407 = vld [vmem:[%s497] sm:$0xf]
        %v1408 = vld [vmem:[%s497 + $0x4] sm:$0xf]
        %v1409 = vld [vmem:[%s497 + $0x8] sm:$0xf]
        %v1410 = vld [vmem:[%s497 + $0xc] sm:$0xf]
        %v1411 = vld [vmem:[%s497 + $0x10] sm:$0xf]
        %v1412 = vld [vmem:[%s497 + $0x14] sm:$0xf]
        %v1413 = vld [vmem:[%s497 + $0x18] sm:$0xf]
        %v1414 = vld [vmem:[%s497 + $0x1c] sm:$0xf]
        %v1415 = vld [vmem:[%s497 + $0x20] sm:$0xf]
        %v1416 = vld [vmem:[%s497 + $0x24] sm:$0xf]
        %v1417 = vld [vmem:[%s497 + $0x28] sm:$0xf]
        %v1418 = vld [vmem:[%s497 + $0x2c] sm:$0xf]
        %v1419 = vld [vmem:[%s497 + $0x30] sm:$0xf]
        %v1420 = vld [vmem:[%s497 + $0x34] sm:$0xf]
        %v1421 = vld [vmem:[%s497 + $0x38] sm:$0xf]
        %v1422 = vld [vmem:[%s497 + $0x3c] sm:$0xf]
        %v1423 = vld [vmem:[%s497 + $0x40] sm:$0xf]
        %v1424 = vld [vmem:[%s497 + $0x44] sm:$0xf]
        %v1425 = vld [vmem:[%s497 + $0x48] sm:$0xf]
        %v1426 = vld [vmem:[%s497 + $0x4c] sm:$0xf]
        %v1427 = vld [vmem:[%s497 + $0x50] sm:$0xf]
        %v1428 = vld [vmem:[%s497 + $0x54] sm:$0xf]
        %v1429 = vld [vmem:[%s497 + $0x58] sm:$0xf]
        %v1430 = vld [vmem:[%s497 + $0x5c] sm:$0xf]
        %v1431 = vld [vmem:[%s497 + $0x60] sm:$0xf]
        %v1432 = vld [vmem:[%s497 + $0x64] sm:$0xf]
        %v1433 = vld [vmem:[%s497 + $0x68] sm:$0xf]
        %v1434 = vld [vmem:[%s497 + $0x6c] sm:$0xf]
        %v1435 = vld [vmem:[%s497 + $0x70] sm:$0xf]
        %v1436 = vld [vmem:[%s497 + $0x74] sm:$0xf]
        %v1437 = vld [vmem:[%s497 + $0x78] sm:$0xf]
        %v1438 = vld [vmem:[%s497 + $0x7c] sm:$0xf]
        %v1439 = vld [vmem:[%s505] sm:$0x1]
        %v1441 = vlaneseq
        %v1442 = vshrl.u32 %v1441, 7
        %v1443 = vsub.s32 0, %v1442
        %v1444 = vrot.slane %v1439, %v1443
        %v1478 = vunpack.c.l.b16 %v1407
        %v1479 = vunpack.c.l.b16 %v1408
        %v1480 = vunpack.c.l.b16 %v1409
        %v1481 = vunpack.c.l.b16 %v1410
        %v1482 = vunpack.c.l.b16 %v1411
        %v1483 = vunpack.c.l.b16 %v1412
        %v1484 = vunpack.c.l.b16 %v1413
        %v1485 = vunpack.c.l.b16 %v1414
        %v1486 = vunpack.c.l.b16 %v1415
        %v1487 = vunpack.c.l.b16 %v1416
        %v1488 = vunpack.c.l.b16 %v1417
        %v1489 = vunpack.c.l.b16 %v1418
        %v1490 = vunpack.c.l.b16 %v1419
        %v1491 = vunpack.c.l.b16 %v1420
        %v1492 = vunpack.c.l.b16 %v1421
        %v1493 = vunpack.c.l.b16 %v1422
        %v1494 = vunpack.c.l.b16 %v1423
        %v1495 = vunpack.c.l.b16 %v1424
        %v1496 = vunpack.c.l.b16 %v1425
        %v1497 = vunpack.c.l.b16 %v1426
        %v1498 = vunpack.c.l.b16 %v1427
        %v1499 = vunpack.c.l.b16 %v1428
        %v1500 = vunpack.c.l.b16 %v1429
        %v1501 = vunpack.c.l.b16 %v1430
        %v1502 = vunpack.c.l.b16 %v1431
        %v1503 = vunpack.c.l.b16 %v1432
        %v1504 = vunpack.c.l.b16 %v1433
        %v1505 = vunpack.c.l.b16 %v1434
        %v1506 = vunpack.c.l.b16 %v1435
        %v1507 = vunpack.c.l.b16 %v1436
        %v1508 = vunpack.c.l.b16 %v1437
        %v1509 = vunpack.c.l.b16 %v1438
        %v1510 = vpack.c.b16 %v1479, %v1478
        %v1511 = vpack.c.b16 %v1481, %v1480
        %v1512 = vpack.c.b16 %v1483, %v1482
        %v1513 = vpack.c.b16 %v1485, %v1484
        %v1514 = vpack.c.b16 %v1487, %v1486
        %v1515 = vpack.c.b16 %v1489, %v1488
        %v1516 = vpack.c.b16 %v1491, %v1490
        %v1517 = vpack.c.b16 %v1493, %v1492
        %v1518 = vpack.c.b16 %v1495, %v1494
        %v1519 = vpack.c.b16 %v1497, %v1496
        %v1520 = vpack.c.b16 %v1499, %v1498
        %v1521 = vpack.c.b16 %v1501, %v1500
        %v1522 = vpack.c.b16 %v1503, %v1502
        %v1523 = vpack.c.b16 %v1505, %v1504
        %v1524 = vpack.c.b16 %v1507, %v1506
        %v1525 = vpack.c.b16 %v1509, %v1508
        %1542 = vmatprep.subr.bf16.mxu0 0
        %1543 = vmatpush1.bf16.msra.mxu0 %v1517
        %1544 = vmatprep.subr.bf16.mxu0 0
        %1545 = vmatpush1.bf16.msra.mxu0 %v1516
        %1546 = vmatprep.subr.bf16.mxu0 0
        %1547 = vmatpush1.bf16.msra.mxu0 %v1515
        %1548 = vmatprep.subr.bf16.mxu0 0
        %1549 = vmatpush1.bf16.msra.mxu0 %v1514
        %1550 = vmatprep.subr.bf16.mxu0 0
        %1551 = vmatpush1.bf16.msra.mxu0 %v1513
        %1552 = vmatprep.subr.bf16.mxu0 0
        %1553 = vmatpush1.bf16.msra.mxu0 %v1512
        %1554 = vmatprep.subr.bf16.mxu0 0
        %1555 = vmatpush1.bf16.msra.mxu0 %v1511
        %1556 = vmatprep.subr.bf16.mxu0 0
        %1557 = vmatpush1.bf16.msra.mxu0 %v1510
        %1558 = vmatprep.subr.bf16.mxu0 0
        %1559 = vmatpush2.bf16.msra.mxu0 %v1525
        %1560 = vmatprep.subr.bf16.mxu0 0
        %1561 = vmatpush2.bf16.msra.mxu0 %v1524
        %1562 = vmatprep.subr.bf16.mxu0 0
        %1563 = vmatpush2.bf16.msra.mxu0 %v1523
        %1564 = vmatprep.subr.bf16.mxu0 0
        %1565 = vmatpush2.bf16.msra.mxu0 %v1522
        %1566 = vmatprep.subr.bf16.mxu0 0
        %1567 = vmatpush2.bf16.msra.mxu0 %v1521
        %1568 = vmatprep.subr.bf16.mxu0 0
        %1569 = vmatpush2.bf16.msra.mxu0 %v1520
        %1570 = vmatprep.subr.bf16.mxu0 0
        %1571 = vmatpush2.bf16.msra.mxu0 %v1519
        %1572 = vmatprep.subr.bf16.mxu0 0
        %1573 = vmatpush2.bf16.msra.mxu0 %v1518
        %1574 = vmatprep.mubr.bf16.mxu0 %v1406
        %1575 = vmatmul.mubr.bf16.gmra.mxu0 %v1405
        %v1576 = vpop.f32.mrf.mxu0
        %v1577 = vadd.f32 %v1444, %v1576
        %v1578 = vpop.f32.mrf.mxu0
        %v1579 = vpop.f32.mrf.mxu0
        %v1580 = vadd.f32 %v1444, %v1579
        %v1581 = vpop.f32.mrf.mxu0
        %1582 = vdwg.mxu0
        %v1583 = vadd.f32 %v1577, %v1247
        %v1584 = vadd.f32 %v1580, %v1248
        %v1585 = vmul.f32 %v1583, %v1583
        %v1586 = vmul.f32 %v1584, %v1584
        %v1587 = vadd.f32 %v1585, %v1586
        %v1588 = vrot.slane %v1587, 4
        %v1589 = vadd.f32 %v1587, %v1588
        %v1590 = vrot.slane %v1589, 2
        %v1591 = vadd.f32 %v1589, %v1590
        %v1592 = vrot.slane %v1591, 1
        %v1593 = vadd.f32 %v1591, %v1592
        %v1594 = vmax.f32 %v1593, 1e-24
        %v1595 = vrsqrt.pop %v1594
        %v1596 = vmul.f32 %v1583, %v1595
        %v1597 = vmul.f32 %v1584, %v1595
        %1598 = vst [vmem:[%s569] sm:$0xff] %v1596
        %1599 = vst [vmem:[%s569 + $0x8] sm:$0xff] %v1597
        %s1600 = sand.u32 %s262, 1
        %s1601 = scalar_lea.sflag [#allocation4], %s1600
        %s1602 = sand.u32 %s262, 1
        %s1603 = smul.addr %s1602, 16
        %s1604 = scalar_lea.vmem [#allocation14], %s1603
        // Predicated region
        $region85: #{encoder.1} parent=51 // pred_check
          %p1605 = pneg %p272
        $region86: #{encoder.1} parent=51 // pred_check_branch
          %1607 = sbr.rel (%p1605) target = $region88
        $region87: #{encoder.1} parent=51 // pred_region
          %s1609 = ssub.s32 256, 256
          %1610 = vsyncadd %s1601, %s1609
          %s1611 = smul.addr %s38, 2
          %s1612 = smul.addr %s1611, 128
          %s1613 = scalar_lea.hbm %s8, %s1612
          %s1614 = sshll.u32 %s1604, 4
          %s1615 = int_to_ptr.vmem [resolvable:$true] %s1614
          %1620 = dma.vmem_to_hbm [thread:$0]  %s1615, 256, %s1613, %s1601, 128, 128, 8
        $region88: #{encoder.1} parent=51 // pred_fallthru
          _
      $region52: #{encoder.1} parent=5 // pred_fallthru
        _
      %p1621 = scmp.le.s32.totalorder 2, %s29
      // Predicated region
      $region89: #{encoder.1} parent=5 // pred_check
        %p1622 = pneg %p1621
      $region90: #{encoder.1} parent=5 // pred_check_branch
        %1624 = sbr.rel (%p1622) target = $region92
      $region91: #{encoder.1} parent=5 // pred_region
        %s1625 = ssub.s32 %s29, 2
        // Predicated region
        $region93: #{encoder.1} parent=91 // pred_check
          %p1626 = pneg %p278
        $region94: #{encoder.1} parent=91 // pred_check_branch
          %1628 = sbr.rel (%p1626) target = $region96
        $region95: #{encoder.1} parent=91 // pred_region
          %s1629 = sand.u32 %s263, 1
          %s1630 = scalar_lea.sflag [#allocation4], %s1629
          %s1631 = sand.u32 %s263, 1
          %s1632 = smul.addr %s1631, 16
          %s1633 = scalar_lea.vmem [#allocation14], %s1632
          %1634 = dma.done %s1630, 256
        $region96: #{encoder.1} parent=91 // pred_fallthru
          _
      $region92: #{encoder.1} parent=5 // pred_fallthru
        _
    $region6: #{encoder.1} parent=1 // loop_footer
      %s33 = sadd.s32 1, %s29
    $region7: #{encoder.1} parent=1 // loop_footer_branch
      %28 = sbr.rel target = $region3
    $region8: #{encoder.1} parent=1 // loop_exit
      _
    %1635 = vsyncpa [#allocation3], 1
    %s1636 = scalar_lea.sflag [#allocation3], 1
    %1637 = vsyncpa %s1636, 1
    %1638 = vsyncpa [#allocation6], 1
    %s1639 = scalar_lea.sflag [#allocation6], 1
    %1640 = vsyncpa %s1639, 1
    %1641 = vsyncpa [#allocation9], 1
    %s1642 = scalar_lea.sflag [#allocation9], 1
    %1643 = vsyncpa %s1642, 1
    %1644 = vsyncpa [#allocation12], 1
    %s1645 = scalar_lea.sflag [#allocation12], 1
    %1646 = vsyncpa %s1645, 1
    %1647 = vsyncpa [#allocation4], 1
    %s1648 = scalar_lea.sflag [#allocation4], 1
    %1649 = vsyncpa %s1648, 1

</llo_original>
